<compile_context>
chip_gen: v6e
topology: v6e:2x2x1
jax: 0.10.0
libtpu: 0.0.40
codegen_flags: <defaults>
</compile_context>

<pallas_src>
import numpy as np
import jax
import jax.numpy as jnp
from jax.experimental import pallas as pl
from jax.experimental.pallas import tpu as pltpu


# ---------------------------------------------------------------------------
# Fused kernel: 4x (1x1 conv + folded BN + ReLU)  +  bilinear x2 upsample
# ---------------------------------------------------------------------------
def fused_head_kernel(x_ref,
                      w1_ref, b1_ref, w2_ref, b2_ref,
                      w3_ref, b3_ref, w4_ref, b4_ref,
                      kt_ref, out_ref):
    # Channels-first: h is (C, H*W).  Each 1x1 conv + folded BN is
    #   h <- relu(W_fold @ h + b_fold), W_fold (Cout, Cin), b_fold (Cout, 1).
    h = x_ref[0]                                                # (384, 256)
    for w_ref, b_ref in ((w1_ref, b1_ref), (w2_ref, b2_ref),
                         (w3_ref, b3_ref), (w4_ref, b4_ref)):
        z = jnp.dot(w_ref[...], h, preferred_element_type=jnp.float32)
        h = jnp.maximum(z + b_ref[...], 0.0)                    # (Cout, 256)
    # Bilinear x2 upsample (align_corners=True) as one matmul with
    # kron(A_h, A_w)^T; output last dim = Ho*Wo = 1024 (lane-dense).
    out_ref[0] = jnp.dot(h, kt_ref[...], preferred_element_type=jnp.float32)


def new_head_forward(x_nchw, folded_params, kt, ho, wo):
    """x_nchw: (N, 384, H, W) f32; folded_params: 4x (W_fold, b_fold);
    kt: (H*W, Ho*Wo) = kron(A_h, A_w)^T."""
    N, Cin, H, W = x_nchw.shape
    P = H * W
    x3 = x_nchw.reshape(N, Cin, P)               # pure reshape, no transpose
    c_out = folded_params[-1][0].shape[0]

    in_specs = [pl.BlockSpec((1, Cin, P), lambda n: (n, 0, 0))]
    flat = [x3]
    for (wf, bf) in folded_params:
        in_specs.append(pl.BlockSpec(wf.shape, lambda n: (0, 0)))
        in_specs.append(pl.BlockSpec(bf.shape, lambda n: (0, 0)))
        flat += [wf, bf]
    in_specs.append(pl.BlockSpec(kt.shape, lambda n: (0, 0)))
    flat.append(kt)

    out = pl.pallas_call(
        fused_head_kernel,
        out_shape=jax.ShapeDtypeStruct((N, c_out, ho * wo), jnp.float32),
        grid_spec=pltpu.PrefetchScalarGridSpec(
            num_scalar_prefetch=0,
            grid=(N,),                           # 2 parallel steps (v7x megacore)
            in_specs=in_specs,
            out_specs=pl.BlockSpec((1, c_out, ho * wo), lambda n: (n, 0, 0)),
        ),
        compiler_params=pltpu.CompilerParams(
            dimension_semantics=("parallel",)),
    )(*flat)
    return out.reshape(N, c_out, ho, wo)         # pure reshape, no transpose


# ---------------------------------------------------------------------------
# Parameter construction (deterministic, synthetic) and BN folding
# ---------------------------------------------------------------------------
def make_layer_params(key, c_in, c_out, eps=1e-5):
    kw, kb, kg, kbeta, km, kv = jax.random.split(key, 6)
    w = jax.random.normal(kw, (c_in, c_out), jnp.float32) * (1.0 / np.sqrt(c_in))
    b = jax.random.normal(kb, (1, c_out), jnp.float32) * 0.1
    gamma = 1.0 + 0.1 * jax.random.normal(kg, (1, c_out), jnp.float32)
    beta = 0.1 * jax.random.normal(kbeta, (1, c_out), jnp.float32)
    run_mean = 0.1 * jax.random.normal(km, (1, c_out), jnp.float32)
    run_var = 0.5 + jnp.abs(jax.random.normal(kv, (1, c_out), jnp.float32))
    scale = gamma / jnp.sqrt(run_var + eps)       # BN eval-mode fold
    shift = beta - run_mean * scale
    return (w, b, scale, shift)


def fold_layer(w, b, scale, shift):
    """Fold conv bias + eval-mode BN into a single (Cout, Cin) weight and
    (Cout, 1) bias, transposed for channels-first matmuls."""
    w_fold = (w * scale).T                        # (c_out, c_in)
    b_fold = (b * scale + shift).T                # (c_out, 1)
    return w_fold, b_fold


def bilinear_matrix(n_in, n_out):
    """Row-interpolation matrix for align_corners=True bilinear resize (numpy)."""
    i = np.arange(n_out)
    src = i * (n_in - 1) / (n_out - 1) if n_out > 1 else np.zeros(n_out)
    i0 = np.floor(src).astype(np.int64)
    i1 = np.minimum(i0 + 1, n_in - 1)
    f = (src - i0).astype(np.float32)
    A = np.zeros((n_out, n_in), np.float32)
    A[np.arange(n_out), i0] += 1.0 - f
    A[np.arange(n_out), i1] += f
    return A


# ---------------------------------------------------------------------------
# Pure-JAX reference (unfolded params, separable upsample)
# ---------------------------------------------------------------------------
def reference_forward(x_nchw, params, a_h, a_w):
    N, Cin, H, W = x_nchw.shape
    h = jnp.transpose(x_nchw, (0, 2, 3, 1)).reshape(N * H * W, Cin)
    for (w, b, s, t) in params:
        h = jnp.maximum((h @ w + b) * s + t, 0.0)
    c_out = h.shape[1]
    y = jnp.transpose(h.reshape(N, H, W, c_out), (0, 3, 1, 2))
    y = jnp.einsum('oh,nchw->ncow', a_h, y)
    y = jnp.einsum('pw,ncow->ncop', a_w, y)
    return y


if __name__ == "__main__":
    key = jax.random.PRNGKey(0)
    k_x, k1, k2, k3, k4 = jax.random.split(key, 5)

    # Module-implied channel sizes: 384 -> 128 -> 64 -> 32 -> 3 (all 1x1 convs).
    N, Cin, H, W = 2, 384, 16, 16
    x = jax.random.normal(k_x, (N, Cin, H, W), jnp.float32)

    raw_params = [
        make_layer_params(k1, 384, 128),
        make_layer_params(k2, 128, 64),
        make_layer_params(k3, 64, 32),
        make_layer_params(k4, 32, 3),
    ]
    folded_params = [fold_layer(*p) for p in raw_params]

    a_h_np = bilinear_matrix(H, 2 * H)            # (32, 16)
    a_w_np = bilinear_matrix(W, 2 * W)            # (32, 16)
    kt = jnp.asarray(np.kron(a_h_np, a_w_np).T)   # (H*W, Ho*Wo) = (256, 1024)

    out = new_head_forward(x, folded_params, kt, 2 * H, 2 * W)
    out = jax.block_until_ready(out)

    ref = jax.block_until_ready(
        reference_forward(x, raw_params, jnp.asarray(a_h_np), jnp.asarray(a_w_np)))
    assert out.shape == (N, 3, 2 * H, 2 * W), out.shape
    assert jnp.allclose(out, ref, atol=1e-3, rtol=1e-3), \
        float(jnp.max(jnp.abs(out - ref)))

    print("KERNEL_OK")
</pallas_src>

<mosaic_0001>
module attributes {stable_mosaic.version = 11 : i64} {
  func.func @fused_head_kernel(%arg0: i32, %arg1: memref<1x384x256xf32, #tpu.memory_space<vmem>>, %arg2: memref<128x384xf32, #tpu.memory_space<vmem>>, %arg3: memref<128x1xf32, #tpu.memory_space<vmem>>, %arg4: memref<64x128xf32, #tpu.memory_space<vmem>>, %arg5: memref<64x1xf32, #tpu.memory_space<vmem>>, %arg6: memref<32x64xf32, #tpu.memory_space<vmem>>, %arg7: memref<32x1xf32, #tpu.memory_space<vmem>>, %arg8: memref<3x32xf32, #tpu.memory_space<vmem>>, %arg9: memref<3x1xf32, #tpu.memory_space<vmem>>, %arg10: memref<256x1024xf32, #tpu.memory_space<vmem>>, %arg11: memref<1x3x1024xf32, #tpu.memory_space<vmem>>) attributes {dimension_semantics = [#tpu.dimension_semantics<parallel>], iteration_bounds = array<i64: 2>, scalar_prefetch = 0 : i64, scratch_operands = 0 : i64, tpu.core_type = #tpu.core_type<tc>, window_params = [{transform_indices = @transform_0, window_bounds = array<i64: 1, 384, 256>}, {pipeline_mode = #tpu.pipeline_mode<synchronous>, transform_indices = @transform_1, window_bounds = array<i64: 128, 384>}, {pipeline_mode = #tpu.pipeline_mode<synchronous>, transform_indices = @transform_2, window_bounds = array<i64: 128, 1>}, {pipeline_mode = #tpu.pipeline_mode<synchronous>, transform_indices = @transform_3, window_bounds = array<i64: 64, 128>}, {pipeline_mode = #tpu.pipeline_mode<synchronous>, transform_indices = @transform_4, window_bounds = array<i64: 64, 1>}, {pipeline_mode = #tpu.pipeline_mode<synchronous>, transform_indices = @transform_5, window_bounds = array<i64: 32, 64>}, {pipeline_mode = #tpu.pipeline_mode<synchronous>, transform_indices = @transform_6, window_bounds = array<i64: 32, 1>}, {pipeline_mode = #tpu.pipeline_mode<synchronous>, transform_indices = @transform_7, window_bounds = array<i64: 3, 32>}, {pipeline_mode = #tpu.pipeline_mode<synchronous>, transform_indices = @transform_8, window_bounds = array<i64: 3, 1>}, {pipeline_mode = #tpu.pipeline_mode<synchronous>, transform_indices = @transform_9, window_bounds = array<i64: 256, 1024>}, {transform_indices = @transform_10, window_bounds = array<i64: 1, 3, 1024>}]} {
    %c0 = arith.constant 0 : index
    %c0_0 = arith.constant 0 : index
    %c0_1 = arith.constant 0 : index
    %0 = vector.load %arg1[%c0, %c0_0, %c0_1] : memref<1x384x256xf32, #tpu.memory_space<vmem>>, vector<1x384x256xf32>
    %1 = vector.shape_cast %0 : vector<1x384x256xf32> to vector<384x256xf32>
    %c0_2 = arith.constant 0 : index
    %c0_3 = arith.constant 0 : index
    %2 = vector.load %arg2[%c0_2, %c0_3] : memref<128x384xf32, #tpu.memory_space<vmem>>, vector<128x384xf32>
    %cst = arith.constant dense<0.000000e+00> : vector<128x256xf32>
    %3 = tpu.matmul %2, %1, %cst {dimension_numbers = #tpu.dot_dimension_numbers<[1], [0], [0], [1], [0, 0, 1, 1], [], []>} : vector<128x384xf32>, vector<384x256xf32>, vector<128x256xf32> -> vector<128x256xf32>
    %c0_4 = arith.constant 0 : index
    %c0_5 = arith.constant 0 : index
    %4 = vector.load %arg3[%c0_4, %c0_5] : memref<128x1xf32, #tpu.memory_space<vmem>>, vector<128x1xf32>
    %5 = vector.broadcast %4 : vector<128x1xf32> to vector<128x256xf32>
    %6 = arith.addf %3, %5 : vector<128x256xf32>
    %cst_6 = arith.constant 0.000000e+00 : f32
    %7 = vector.broadcast %cst_6 : f32 to vector<128x256xf32>
    %8 = arith.maximumf %6, %7 : vector<128x256xf32>
    %c0_7 = arith.constant 0 : index
    %c0_8 = arith.constant 0 : index
    %9 = vector.load %arg4[%c0_7, %c0_8] : memref<64x128xf32, #tpu.memory_space<vmem>>, vector<64x128xf32>
    %cst_9 = arith.constant dense<0.000000e+00> : vector<64x256xf32>
    %10 = tpu.matmul %9, %8, %cst_9 {dimension_numbers = #tpu.dot_dimension_numbers<[1], [0], [0], [1], [0, 0, 1, 1], [], []>} : vector<64x128xf32>, vector<128x256xf32>, vector<64x256xf32> -> vector<64x256xf32>
    %c0_10 = arith.constant 0 : index
    %c0_11 = arith.constant 0 : index
    %11 = vector.load %arg5[%c0_10, %c0_11] : memref<64x1xf32, #tpu.memory_space<vmem>>, vector<64x1xf32>
    %12 = vector.broadcast %11 : vector<64x1xf32> to vector<64x256xf32>
    %13 = arith.addf %10, %12 : vector<64x256xf32>
    %cst_12 = arith.constant 0.000000e+00 : f32
    %14 = vector.broadcast %cst_12 : f32 to vector<64x256xf32>
    %15 = arith.maximumf %13, %14 : vector<64x256xf32>
    %c0_13 = arith.constant 0 : index
    %c0_14 = arith.constant 0 : index
    %16 = vector.load %arg6[%c0_13, %c0_14] : memref<32x64xf32, #tpu.memory_space<vmem>>, vector<32x64xf32>
    %cst_15 = arith.constant dense<0.000000e+00> : vector<32x256xf32>
    %17 = tpu.matmul %16, %15, %cst_15 {dimension_numbers = #tpu.dot_dimension_numbers<[1], [0], [0], [1], [0, 0, 1, 1], [], []>} : vector<32x64xf32>, vector<64x256xf32>, vector<32x256xf32> -> vector<32x256xf32>
    %c0_16 = arith.constant 0 : index
    %c0_17 = arith.constant 0 : index
    %18 = vector.load %arg7[%c0_16, %c0_17] : memref<32x1xf32, #tpu.memory_space<vmem>>, vector<32x1xf32>
    %19 = vector.broadcast %18 : vector<32x1xf32> to vector<32x256xf32>
    %20 = arith.addf %17, %19 : vector<32x256xf32>
    %cst_18 = arith.constant 0.000000e+00 : f32
    %21 = vector.broadcast %cst_18 : f32 to vector<32x256xf32>
    %22 = arith.maximumf %20, %21 : vector<32x256xf32>
    %c0_19 = arith.constant 0 : index
    %c0_20 = arith.constant 0 : index
    %23 = vector.load %arg8[%c0_19, %c0_20] : memref<3x32xf32, #tpu.memory_space<vmem>>, vector<3x32xf32>
    %cst_21 = arith.constant dense<0.000000e+00> : vector<3x256xf32>
    %24 = tpu.matmul %23, %22, %cst_21 {dimension_numbers = #tpu.dot_dimension_numbers<[1], [0], [0], [1], [0, 0, 1, 1], [], []>} : vector<3x32xf32>, vector<32x256xf32>, vector<3x256xf32> -> vector<3x256xf32>
    %c0_22 = arith.constant 0 : index
    %c0_23 = arith.constant 0 : index
    %25 = vector.load %arg9[%c0_22, %c0_23] : memref<3x1xf32, #tpu.memory_space<vmem>>, vector<3x1xf32>
    %26 = vector.broadcast %25 : vector<3x1xf32> to vector<3x256xf32>
    %27 = arith.addf %24, %26 : vector<3x256xf32>
    %cst_24 = arith.constant 0.000000e+00 : f32
    %28 = vector.broadcast %cst_24 : f32 to vector<3x256xf32>
    %29 = arith.maximumf %27, %28 : vector<3x256xf32>
    %c0_25 = arith.constant 0 : index
    %c0_26 = arith.constant 0 : index
    %30 = vector.load %arg10[%c0_25, %c0_26] : memref<256x1024xf32, #tpu.memory_space<vmem>>, vector<256x1024xf32>
    %cst_27 = arith.constant dense<0.000000e+00> : vector<3x1024xf32>
    %31 = tpu.matmul %29, %30, %cst_27 {dimension_numbers = #tpu.dot_dimension_numbers<[1], [0], [0], [1], [0, 0, 1, 1], [], []>} : vector<3x256xf32>, vector<256x1024xf32>, vector<3x1024xf32> -> vector<3x1024xf32>
    %c0_28 = arith.constant 0 : index
    %c0_29 = arith.constant 0 : index
    %c0_30 = arith.constant 0 : index
    %32 = vector.load %arg11[%c0_28, %c0_29, %c0_30] : memref<1x3x1024xf32, #tpu.memory_space<vmem>>, vector<1x3x1024xf32>
    %33 = vector.shape_cast %32 : vector<1x3x1024xf32> to vector<3x1024xf32>
    %34 = vector.shape_cast %31 : vector<3x1024xf32> to vector<1x3x1024xf32>
    tpu.vector_store %arg11[%c0_28, %c0_29, %c0_30], %34 {strides = array<i32>} : memref<1x3x1024xf32, #tpu.memory_space<vmem>>, vector<1x3x1024xf32>,
    return
  }
  func.func @transform_0(%arg0: i32) -> (i32, i32, i32) {
    %c0_i32 = arith.constant 0 : i32
    %c0_i32_0 = arith.constant 0 : i32
    %c0_i32_1 = arith.constant 0 : i32
    return %arg0, %c0_i32, %c0_i32_0 : i32, i32, i32
  }
  func.func @transform_1(%arg0: i32) -> (i32, i32) {
    %c0_i32 = arith.constant 0 : i32
    %c0_i32_0 = arith.constant 0 : i32
    %c0_i32_1 = arith.constant 0 : i32
    return %c0_i32, %c0_i32_0 : i32, i32
  }
  func.func @transform_2(%arg0: i32) -> (i32, i32) {
    %c0_i32 = arith.constant 0 : i32
    %c0_i32_0 = arith.constant 0 : i32
    %c0_i32_1 = arith.constant 0 : i32
    return %c0_i32, %c0_i32_0 : i32, i32
  }
  func.func @transform_3(%arg0: i32) -> (i32, i32) {
    %c0_i32 = arith.constant 0 : i32
    %c0_i32_0 = arith.constant 0 : i32
    %c0_i32_1 = arith.constant 0 : i32
    return %c0_i32, %c0_i32_0 : i32, i32
  }
  func.func @transform_4(%arg0: i32) -> (i32, i32) {
    %c0_i32 = arith.constant 0 : i32
    %c0_i32_0 = arith.constant 0 : i32
    %c0_i32_1 = arith.constant 0 : i32
    return %c0_i32, %c0_i32_0 : i32, i32
  }
  func.func @transform_5(%arg0: i32) -> (i32, i32) {
    %c0_i32 = arith.constant 0 : i32
    %c0_i32_0 = arith.constant 0 : i32
    %c0_i32_1 = arith.constant 0 : i32
    return %c0_i32, %c0_i32_0 : i32, i32
  }
  func.func @transform_6(%arg0: i32) -> (i32, i32) {
    %c0_i32 = arith.constant 0 : i32
    %c0_i32_0 = arith.constant 0 : i32
    %c0_i32_1 = arith.constant 0 : i32
    return %c0_i32, %c0_i32_0 : i32, i32
  }
  func.func @transform_7(%arg0: i32) -> (i32, i32) {
    %c0_i32 = arith.constant 0 : i32
    %c0_i32_0 = arith.constant 0 : i32
    %c0_i32_1 = arith.constant 0 : i32
    return %c0_i32, %c0_i32_0 : i32, i32
  }
  func.func @transform_8(%arg0: i32) -> (i32, i32) {
    %c0_i32 = arith.constant 0 : i32
    %c0_i32_0 = arith.constant 0 : i32
    %c0_i32_1 = arith.constant 0 : i32
    return %c0_i32, %c0_i32_0 : i32, i32
  }
  func.func @transform_9(%arg0: i32) -> (i32, i32) {
    %c0_i32 = arith.constant 0 : i32
    %c0_i32_0 = arith.constant 0 : i32
    %c0_i32_1 = arith.constant 0 : i32
    return %c0_i32, %c0_i32_0 : i32, i32
  }
  func.func @transform_10(%arg0: i32) -> (i32, i32, i32) {
    %c0_i32 = arith.constant 0 : i32
    %c0_i32_0 = arith.constant 0 : i32
    %c0_i32_1 = arith.constant 0 : i32
    return %arg0, %c0_i32, %c0_i32_0 : i32, i32, i32
  }
}

</mosaic_0001>

<llo_original>
// kernel: tpu_custom_call.1
$region0: #{tpu_custom_call.1}
  #allocation0 [shape = 'u32[]', space=smem, size = 0x4, offset = 0x4, fixed_abs, tag = 'smem constant byte address 0x4 - core index']
  #allocation1 [shape = 'u32[144,128]{1,0:T(1,128)}', space=vmem, size = 0x12000, scoped, tag = 'internal scratch']
  %s0 = inlined_call_operand.hbm [shape: f32[2,384,256], index: 0, kind: input, shape index: {}]
  %s1 = inlined_call_operand.hbm [shape: f32[128,384], index: 1, kind: input, shape index: {}]
  %s2 = inlined_call_operand.vmem [shape: f32[128,1], index: 2, kind: input, shape index: {}]
  %s3 = inlined_call_operand.vmem [shape: f32[64,128], index: 3, kind: input, shape index: {}]
  %s4 = inlined_call_operand.vmem [shape: f32[64,1], index: 4, kind: input, shape index: {}]
  %s5 = inlined_call_operand.vmem [shape: f32[32,64], index: 5, kind: input, shape index: {}]
  %s6 = inlined_call_operand.vmem [shape: f32[32,1], index: 6, kind: input, shape index: {}]
  %s7 = inlined_call_operand.vmem [shape: f32[3,32], index: 7, kind: input, shape index: {}]
  %s8 = inlined_call_operand.vmem [shape: f32[3,1], index: 8, kind: input, shape index: {}]
  %s9 = inlined_call_operand.hbm [shape: f32[256,1024], index: 9, kind: input, shape index: {}]
  %s10 = inlined_call_operand.vmem [shape: f32[2,3,1024], index: 10, kind: output, shape index: {}]
  %s11 = sld [smem:[#allocation0]]
  $region85: #{tpu_custom_call.1} parent=0
    _
  %s13 = ssub.s32 1, %s11
  %s14 = scalar_select 0, %s13, %s11
  $region1: #{tpu_custom_call.1} parent=0
    #allocation2 [shape = 'u8[786432]{0}', space=vmem, size = 0xc0000, scoped, tag = 'input window, operand 0']
    #allocation3 [shape = 's32[2]{0}', space=sflag, size = 0x8, scoped, tag = 'scoped memory for tpu_custom_call.1']
    #allocation4 [shape = 'u8[196608]{0}', space=vmem, size = 0x30000, scoped, tag = 'input window, operand 1, single buffered']
    #allocation5 [shape = 's32[1]{0}', space=sflag, size = 0x4, scoped, tag = 'scoped memory for tpu_custom_call.1']
    #allocation6 [shape = 'u8[1048576]{0}', space=vmem, size = 0x100000, scoped, tag = 'input window, operand 9, single buffered']
    %15 = vsyncpa [#allocation3], 0
    %s16 = scalar_lea.sflag [#allocation3], 1
    %17 = vsyncpa %s16, 0
    %18 = vsyncpa [#allocation5], 0
    loop: start=0, step=1, limit=4
    $region2: #{tpu_custom_call.1} parent=1 // loop_pre_header
      _
    $region3: #{tpu_custom_call.1} parent=1 // loop_header
      %s20 = sphi 0, %s24
      %p21 = scmp.ge.s32.totalorder %s20, 4
      %s30 = sphi 0, %s32
      %s33 = sphi 0, %s30
      %s34 = sphi 0, %s33
      %s50 = sphi 0, %s34
      %s54 = sphi 0, %s54
      %s56 = sphi 0, %s54
      %s57 = sphi 0, %s56
      %s71 = sphi 0, %s57
      %s75 = sphi 0, %s75
      %s77 = sphi 0, %s75
      %s78 = sphi 0, %s77
      %s92 = sphi 0, %s78
      %s96 = sphi 0, %s96
      %s98 = sphi 0, %s96
      %s99 = sphi 0, %s98
      %s113 = sphi 0, %s99
      %s117 = sphi 0, %s117
      %s119 = sphi 0, %s117
      %s120 = sphi 0, %s119
      %s134 = sphi 0, %s120
      %s138 = sphi 0, %s138
      %s140 = sphi 0, %s138
      %s141 = sphi 0, %s140
      %s155 = sphi 0, %s141
      %s159 = sphi 0, %s159
      %s161 = sphi 0, %s159
      %s162 = sphi 0, %s161
      %s176 = sphi 0, %s162
      %s180 = sphi 0, %s180
      %s182 = sphi 0, %s180
      %s183 = sphi 0, %s182
      %s197 = sphi 0, %s183
      %s201 = sphi 0, %s201
      %s203 = sphi 0, %s201
      %s204 = sphi 0, %s203
      %s218 = sphi 0, %s204
      %s222 = sphi 0, %s222
      %s224 = sphi 0, %s222
      %s225 = sphi 0, %s224
      %s239 = sphi 0, %s225
      %s245 = sphi 0, %s247
      %s248 = sphi 0, %s245
      %s249 = sphi 0, %s248
      %s265 = sphi 0, %s249
    $region4: #{tpu_custom_call.1} parent=1 // loop_header_branch
      %23 = sbr.rel (%p21) target = $region8
    $region5: #{tpu_custom_call.1} parent=1 // loop_body
      %s25 = ssub.s32 %s20, 1
      %s26 = ssub.s32 %s20, 2
      %s27 = sadd.s32 %s20, 1
      %s28 = ssub.s32 %s20, %s27
      %p29 = scmp.eq.s32.totalorder %s28, 0
      %s31 = sadd.s32 %s30, 1
      %s32 = scalar_select %p29, %s30, %s31
      %p35 = pneg %p29
      %p36 = scmp.eq.s32.totalorder %s20, 1
      %p37 = por %p35, %p36
      %p38 = scmp.ne.s32.totalorder %s30, %s33
      %p39 = scmp.eq.s32.totalorder %s20, 0
      %p40 = por %p38, %p39
      %p41 = scmp.ne.s32.totalorder %s30, %s33
      %p42 = scmp.eq.s32.totalorder %s25, 1
      %p43 = por %p41, %p42
      %p44 = scmp.ne.s32.totalorder %s33, %s34
      %p45 = scmp.eq.s32.totalorder %s25, 0
      %p46 = por %p44, %p45
      %p47 = scmp.ne.s32.totalorder %s33, %s34
      %p48 = scmp.eq.s32.totalorder %s26, 1
      %p49 = por %p47, %p48
      %p51 = scmp.ne.s32.totalorder %s34, %s50
      %p52 = scmp.eq.s32.totalorder %s26, 0
      %p53 = por %p51, %p52
      %s55 = sadd.s32 %s54, 1
      %p58 = scmp.eq.s32.totalorder %s20, 1
      %p59 = scmp.ne.s32.totalorder %s54, %s56
      %p60 = scmp.eq.s32.totalorder %s20, 0
      %p61 = por %p59, %p60
      %p62 = scmp.ne.s32.totalorder %s54, %s56
      %p63 = scmp.eq.s32.totalorder %s25, 1
      %p64 = por %p62, %p63
      %p65 = scmp.ne.s32.totalorder %s56, %s57
      %p66 = scmp.eq.s32.totalorder %s25, 0
      %p67 = por %p65, %p66
      %p68 = scmp.ne.s32.totalorder %s56, %s57
      %p69 = scmp.eq.s32.totalorder %s26, 1
      %p70 = por %p68, %p69
      %p72 = scmp.ne.s32.totalorder %s57, %s71
      %p73 = scmp.eq.s32.totalorder %s26, 0
      %p74 = por %p72, %p73
      %s76 = sadd.s32 %s75, 1
      %p79 = scmp.eq.s32.totalorder %s20, 1
      %p80 = scmp.ne.s32.totalorder %s75, %s77
      %p81 = scmp.eq.s32.totalorder %s20, 0
      %p82 = por %p80, %p81
      %p83 = scmp.ne.s32.totalorder %s75, %s77
      %p84 = scmp.eq.s32.totalorder %s25, 1
      %p85 = por %p83, %p84
      %p86 = scmp.ne.s32.totalorder %s77, %s78
      %p87 = scmp.eq.s32.totalorder %s25, 0
      %p88 = por %p86, %p87
      %p89 = scmp.ne.s32.totalorder %s77, %s78
      %p90 = scmp.eq.s32.totalorder %s26, 1
      %p91 = por %p89, %p90
      %p93 = scmp.ne.s32.totalorder %s78, %s92
      %p94 = scmp.eq.s32.totalorder %s26, 0
      %p95 = por %p93, %p94
      %s97 = sadd.s32 %s96, 1
      %p100 = scmp.eq.s32.totalorder %s20, 1
      %p101 = scmp.ne.s32.totalorder %s96, %s98
      %p102 = scmp.eq.s32.totalorder %s20, 0
      %p103 = por %p101, %p102
      %p104 = scmp.ne.s32.totalorder %s96, %s98
      %p105 = scmp.eq.s32.totalorder %s25, 1
      %p106 = por %p104, %p105
      %p107 = scmp.ne.s32.totalorder %s98, %s99
      %p108 = scmp.eq.s32.totalorder %s25, 0
      %p109 = por %p107, %p108
      %p110 = scmp.ne.s32.totalorder %s98, %s99
      %p111 = scmp.eq.s32.totalorder %s26, 1
      %p112 = por %p110, %p111
      %p114 = scmp.ne.s32.totalorder %s99, %s113
      %p115 = scmp.eq.s32.totalorder %s26, 0
      %p116 = por %p114, %p115
      %s118 = sadd.s32 %s117, 1
      %p121 = scmp.eq.s32.totalorder %s20, 1
      %p122 = scmp.ne.s32.totalorder %s117, %s119
      %p123 = scmp.eq.s32.totalorder %s20, 0
      %p124 = por %p122, %p123
      %p125 = scmp.ne.s32.totalorder %s117, %s119
      %p126 = scmp.eq.s32.totalorder %s25, 1
      %p127 = por %p125, %p126
      %p128 = scmp.ne.s32.totalorder %s119, %s120
      %p129 = scmp.eq.s32.totalorder %s25, 0
      %p130 = por %p128, %p129
      %p131 = scmp.ne.s32.totalorder %s119, %s120
      %p132 = scmp.eq.s32.totalorder %s26, 1
      %p133 = por %p131, %p132
      %p135 = scmp.ne.s32.totalorder %s120, %s134
      %p136 = scmp.eq.s32.totalorder %s26, 0
      %p137 = por %p135, %p136
      %s139 = sadd.s32 %s138, 1
      %p142 = scmp.eq.s32.totalorder %s20, 1
      %p143 = scmp.ne.s32.totalorder %s138, %s140
      %p144 = scmp.eq.s32.totalorder %s20, 0
      %p145 = por %p143, %p144
      %p146 = scmp.ne.s32.totalorder %s138, %s140
      %p147 = scmp.eq.s32.totalorder %s25, 1
      %p148 = por %p146, %p147
      %p149 = scmp.ne.s32.totalorder %s140, %s141
      %p150 = scmp.eq.s32.totalorder %s25, 0
      %p151 = por %p149, %p150
      %p152 = scmp.ne.s32.totalorder %s140, %s141
      %p153 = scmp.eq.s32.totalorder %s26, 1
      %p154 = por %p152, %p153
      %p156 = scmp.ne.s32.totalorder %s141, %s155
      %p157 = scmp.eq.s32.totalorder %s26, 0
      %p158 = por %p156, %p157
      %s160 = sadd.s32 %s159, 1
      %p163 = scmp.eq.s32.totalorder %s20, 1
      %p164 = scmp.ne.s32.totalorder %s159, %s161
      %p165 = scmp.eq.s32.totalorder %s20, 0
      %p166 = por %p164, %p165
      %p167 = scmp.ne.s32.totalorder %s159, %s161
      %p168 = scmp.eq.s32.totalorder %s25, 1
      %p169 = por %p167, %p168
      %p170 = scmp.ne.s32.totalorder %s161, %s162
      %p171 = scmp.eq.s32.totalorder %s25, 0
      %p172 = por %p170, %p171
      %p173 = scmp.ne.s32.totalorder %s161, %s162
      %p174 = scmp.eq.s32.totalorder %s26, 1
      %p175 = por %p173, %p174
      %p177 = scmp.ne.s32.totalorder %s162, %s176
      %p178 = scmp.eq.s32.totalorder %s26, 0
      %p179 = por %p177, %p178
      %s181 = sadd.s32 %s180, 1
      %p184 = scmp.eq.s32.totalorder %s20, 1
      %p185 = scmp.ne.s32.totalorder %s180, %s182
      %p186 = scmp.eq.s32.totalorder %s20, 0
      %p187 = por %p185, %p186
      %p188 = scmp.ne.s32.totalorder %s180, %s182
      %p189 = scmp.eq.s32.totalorder %s25, 1
      %p190 = por %p188, %p189
      %p191 = scmp.ne.s32.totalorder %s182, %s183
      %p192 = scmp.eq.s32.totalorder %s25, 0
      %p193 = por %p191, %p192
      %p194 = scmp.ne.s32.totalorder %s182, %s183
      %p195 = scmp.eq.s32.totalorder %s26, 1
      %p196 = por %p194, %p195
      %p198 = scmp.ne.s32.totalorder %s183, %s197
      %p199 = scmp.eq.s32.totalorder %s26, 0
      %p200 = por %p198, %p199
      %s202 = sadd.s32 %s201, 1
      %p205 = scmp.eq.s32.totalorder %s20, 1
      %p206 = scmp.ne.s32.totalorder %s201, %s203
      %p207 = scmp.eq.s32.totalorder %s20, 0
      %p208 = por %p206, %p207
      %p209 = scmp.ne.s32.totalorder %s201, %s203
      %p210 = scmp.eq.s32.totalorder %s25, 1
      %p211 = por %p209, %p210
      %p212 = scmp.ne.s32.totalorder %s203, %s204
      %p213 = scmp.eq.s32.totalorder %s25, 0
      %p214 = por %p212, %p213
      %p215 = scmp.ne.s32.totalorder %s203, %s204
      %p216 = scmp.eq.s32.totalorder %s26, 1
      %p217 = por %p215, %p216
      %p219 = scmp.ne.s32.totalorder %s204, %s218
      %p220 = scmp.eq.s32.totalorder %s26, 0
      %p221 = por %p219, %p220
      %s223 = sadd.s32 %s222, 1
      %p226 = scmp.eq.s32.totalorder %s20, 1
      %p227 = scmp.ne.s32.totalorder %s222, %s224
      %p228 = scmp.eq.s32.totalorder %s20, 0
      %p229 = por %p227, %p228
      %p230 = scmp.ne.s32.totalorder %s222, %s224
      %p231 = scmp.eq.s32.totalorder %s25, 1
      %p232 = por %p230, %p231
      %p233 = scmp.ne.s32.totalorder %s224, %s225
      %p234 = scmp.eq.s32.totalorder %s25, 0
      %p235 = por %p233, %p234
      %p236 = scmp.ne.s32.totalorder %s224, %s225
      %p237 = scmp.eq.s32.totalorder %s26, 1
      %p238 = por %p236, %p237
      %p240 = scmp.ne.s32.totalorder %s225, %s239
      %p241 = scmp.eq.s32.totalorder %s26, 0
      %p242 = por %p240, %p241
      %s243 = ssub.s32 %s20, %s27
      %p244 = scmp.eq.s32.totalorder %s243, 0
      %s246 = sadd.s32 %s245, 1
      %s247 = scalar_select %p244, %s245, %s246
      %p250 = pneg %p244
      %p251 = scmp.eq.s32.totalorder %s20, 1
      %p252 = por %p250, %p251
      %p253 = scmp.ne.s32.totalorder %s245, %s248
      %p254 = scmp.eq.s32.totalorder %s20, 0
      %p255 = por %p253, %p254
      %p256 = scmp.ne.s32.totalorder %s245, %s248
      %p257 = scmp.eq.s32.totalorder %s25, 1
      %p258 = por %p256, %p257
      %p259 = scmp.ne.s32.totalorder %s248, %s249
      %p260 = scmp.eq.s32.totalorder %s25, 0
      %p261 = por %p259, %p260
      %p262 = scmp.ne.s32.totalorder %s248, %s249
      %p263 = scmp.eq.s32.totalorder %s26, 1
      %p264 = por %p262, %p263
      %p266 = scmp.ne.s32.totalorder %s249, %s265
      %p267 = scmp.eq.s32.totalorder %s26, 0
      %p268 = por %p266, %p267
      %p269 = scmp.le.s32.totalorder 1, %s20
      %p270 = scmp.lt.s32.totalorder %s20, 3
      %p271 = pnand %p269, %p270
      %p272 = pneg %p271
      // Predicated region
      $region9: #{tpu_custom_call.1} parent=5 // pred_check
        _
      $region10: #{tpu_custom_call.1} parent=5 // pred_check_branch
        %274 = sbr.rel (%p271) target = $region12
      $region11: #{tpu_custom_call.1} parent=5 // pred_region
        %s275 = ssub.s32 %s20, 1
        // Predicated region
        $region13: #{tpu_custom_call.1} parent=11 // pred_check
          %p276 = pneg %p67
        $region14: #{tpu_custom_call.1} parent=11 // pred_check_branch
          %278 = sbr.rel (%p276) target = $region16
        $region15: #{tpu_custom_call.1} parent=11 // pred_region
          %s280 = ssub.s32 6144, 6144
          %281 = vsyncadd [#allocation5], %s280
          %s282 = sshll.u32 [#allocation4], 4
          %s283 = int_to_ptr.vmem [resolvable:$true] %s282
          %288 = dma.hbm_to_vmem [thread:$0]  %s1, 6144, %s283, [#allocation5], 384, 384, 24
        $region16: #{tpu_custom_call.1} parent=11 // pred_fallthru
          _
        // Predicated region
        $region17: #{tpu_custom_call.1} parent=11 // pred_check
          %p289 = pneg %p88
        $region18: #{tpu_custom_call.1} parent=11 // pred_check_branch
          %291 = sbr.rel (%p289) target = $region20
        $region19: #{tpu_custom_call.1} parent=11 // pred_region
          _
        $region20: #{tpu_custom_call.1} parent=11 // pred_fallthru
          _
        // Predicated region
        $region21: #{tpu_custom_call.1} parent=11 // pred_check
          %p292 = pneg %p109
        $region22: #{tpu_custom_call.1} parent=11 // pred_check_branch
          %294 = sbr.rel (%p292) target = $region24
        $region23: #{tpu_custom_call.1} parent=11 // pred_region
          _
        $region24: #{tpu_custom_call.1} parent=11 // pred_fallthru
          _
        // Predicated region
        $region25: #{tpu_custom_call.1} parent=11 // pred_check
          %p295 = pneg %p130
        $region26: #{tpu_custom_call.1} parent=11 // pred_check_branch
          %297 = sbr.rel (%p295) target = $region28
        $region27: #{tpu_custom_call.1} parent=11 // pred_region
          _
        $region28: #{tpu_custom_call.1} parent=11 // pred_fallthru
          _
        // Predicated region
        $region29: #{tpu_custom_call.1} parent=11 // pred_check
          %p298 = pneg %p151
        $region30: #{tpu_custom_call.1} parent=11 // pred_check_branch
          %300 = sbr.rel (%p298) target = $region32
        $region31: #{tpu_custom_call.1} parent=11 // pred_region
          _
        $region32: #{tpu_custom_call.1} parent=11 // pred_fallthru
          _
        // Predicated region
        $region33: #{tpu_custom_call.1} parent=11 // pred_check
          %p301 = pneg %p172
        $region34: #{tpu_custom_call.1} parent=11 // pred_check_branch
          %303 = sbr.rel (%p301) target = $region36
        $region35: #{tpu_custom_call.1} parent=11 // pred_region
          _
        $region36: #{tpu_custom_call.1} parent=11 // pred_fallthru
          _
        // Predicated region
        $region37: #{tpu_custom_call.1} parent=11 // pred_check
          %p304 = pneg %p193
        $region38: #{tpu_custom_call.1} parent=11 // pred_check_branch
          %306 = sbr.rel (%p304) target = $region40
        $region39: #{tpu_custom_call.1} parent=11 // pred_region
          _
        $region40: #{tpu_custom_call.1} parent=11 // pred_fallthru
          _
        // Predicated region
        $region41: #{tpu_custom_call.1} parent=11 // pred_check
          %p307 = pneg %p214
        $region42: #{tpu_custom_call.1} parent=11 // pred_check_branch
          %309 = sbr.rel (%p307) target = $region44
        $region43: #{tpu_custom_call.1} parent=11 // pred_region
          _
        $region44: #{tpu_custom_call.1} parent=11 // pred_fallthru
          _
        // Predicated region
        $region45: #{tpu_custom_call.1} parent=11 // pred_check
          %p310 = pneg %p235
        $region46: #{tpu_custom_call.1} parent=11 // pred_check_branch
          %312 = sbr.rel (%p310) target = $region48
        $region47: #{tpu_custom_call.1} parent=11 // pred_region
          %s314 = ssub.s32 32768, 32768
          %315 = vsyncadd [#allocation5], %s314
          %s316 = sshll.u32 [#allocation6], 4
          %s317 = int_to_ptr.vmem [resolvable:$true] %s316
          %322 = dma.hbm_to_vmem [thread:$0]  %s9, 32768, %s317, [#allocation5], 1024, 1024, 64
        $region48: #{tpu_custom_call.1} parent=11 // pred_fallthru
          _
      $region12: #{tpu_custom_call.1} parent=5 // pred_fallthru
        _
      %p323 = scmp.lt.s32.totalorder %s20, 2
      // Predicated region
      $region49: #{tpu_custom_call.1} parent=5 // pred_check
        %p324 = pneg %p323
      $region50: #{tpu_custom_call.1} parent=5 // pred_check_branch
        %326 = sbr.rel (%p324) target = $region52
      $region51: #{tpu_custom_call.1} parent=5 // pred_region
        // Predicated region
        $region53: #{tpu_custom_call.1} parent=51 // pred_check
          %p327 = pneg %p40
        $region54: #{tpu_custom_call.1} parent=51 // pred_check_branch
          %329 = sbr.rel (%p327) target = $region56
        $region55: #{tpu_custom_call.1} parent=51 // pred_region
          %s330 = sand.u32 %s30, 1
          %s331 = scalar_lea.sflag [#allocation3], %s330
          %s332 = sand.u32 %s30, 1
          %s333 = smul.addr %s332, 768
          %s334 = scalar_lea.vmem [#allocation2], %s333
          %s336 = ssub.s32 12288, 12288
          %337 = vsyncadd %s331, %s336
          %s338 = smul.addr %s20, 96
          %s339 = smul.addr %s338, 128
          %s340 = scalar_lea.hbm %s0, %s339
          %s341 = sshll.u32 %s334, 4
          %s342 = int_to_ptr.vmem [resolvable:$true] %s341
          %347 = dma.hbm_to_vmem [thread:$0]  %s340, 12288, %s342, %s331, 256, 256, 16
        $region56: #{tpu_custom_call.1} parent=51 // pred_fallthru
          _
      $region52: #{tpu_custom_call.1} parent=5 // pred_fallthru
        _
      %p348 = scmp.le.s32.totalorder 1, %s20
      %p349 = scmp.lt.s32.totalorder %s20, 3
      %p350 = pnand %p348, %p349
      %p351 = pneg %p350
      // Predicated region
      $region57: #{tpu_custom_call.1} parent=5 // pred_check
        _
      $region58: #{tpu_custom_call.1} parent=5 // pred_check_branch
        %353 = sbr.rel (%p350) target = $region60
      $region59: #{tpu_custom_call.1} parent=5 // pred_region
        %s354 = ssub.s32 %s20, 1
        %s355 = sand.u32 %s33, 1
        %s356 = scalar_lea.sflag [#allocation3], %s355
        %s357 = sand.u32 %s33, 1
        %s358 = smul.addr %s357, 768
        %s359 = scalar_lea.vmem [#allocation2], %s358
        // Predicated region
        $region61: #{tpu_custom_call.1} parent=59 // pred_check
          %p360 = pneg %p46
        $region62: #{tpu_custom_call.1} parent=59 // pred_check_branch
          %362 = sbr.rel (%p360) target = $region64
        $region63: #{tpu_custom_call.1} parent=59 // pred_region
          %363 = dma.done %s356, 12288
        $region64: #{tpu_custom_call.1} parent=59 // pred_fallthru
          _
        // Predicated region
        $region65: #{tpu_custom_call.1} parent=59 // pred_check
          %p364 = pneg %p67
        $region66: #{tpu_custom_call.1} parent=59 // pred_check_branch
          %366 = sbr.rel (%p364) target = $region68
        $region67: #{tpu_custom_call.1} parent=59 // pred_region
          %367 = dma.done [#allocation5], 6144
        $region68: #{tpu_custom_call.1} parent=59 // pred_fallthru
          _
        // Predicated region
        $region69: #{tpu_custom_call.1} parent=59 // pred_check
          %p368 = pneg %p235
        $region70: #{tpu_custom_call.1} parent=59 // pred_check_branch
          %370 = sbr.rel (%p368) target = $region72
        $region71: #{tpu_custom_call.1} parent=59 // pred_region
          %371 = dma.done [#allocation5], 32768
        $region72: #{tpu_custom_call.1} parent=59 // pred_fallthru
          _
        %s372 = sand.u32 %s33, 1
        %s373 = scalar_lea.sflag [#allocation3], %s372
        %s374 = sand.u32 %s33, 1
        %s375 = smul.addr %s374, 768
        %s376 = scalar_lea.vmem [#allocation2], %s375
        %p377 = pneg %p46
        %p378 = pneg %p43
        %p379 = pneg %p67
        %p380 = pneg %p64
        %p381 = pneg %p88
        %p382 = pneg %p85
        %p383 = pneg %p109
        %p384 = pneg %p106
        %p385 = pneg %p130
        %p386 = pneg %p127
        %p387 = pneg %p151
        %p388 = pneg %p148
        %p389 = pneg %p172
        %p390 = pneg %p169
        %p391 = pneg %p193
        %p392 = pneg %p190
        %p393 = pneg %p214
        %p394 = pneg %p211
        %p395 = pneg %p235
        %p396 = pneg %p232
        %p397 = pneg %p261
        %p398 = pneg %p258
        %p399 = scmp.lt.s32.totalorder %s25, 1
        %s400 = scalar_select %p399, %s25, 1
        %s401 = smul.addr %s400, 8
        %s402 = smul.addr %s401, 4
        %s403 = scalar_lea.vmem %s10, %s402
        %p404 = scmp.lt.s32.totalorder %s25, 1
        %s405 = scalar_select %p404, %s25, 1
        %s406 = smul.addr %s405, 8
        %s407 = smul.addr %s406, 4
        %s408 = scalar_lea.vmem %s10, %s407
        %v409 = vld [vmem:[%s359] sm:$0xff]
        %v410 = vld [vmem:[%s359 + $0x8] sm:$0xff]
        %v411 = vld [vmem:[%s359 + $0x10] sm:$0xff]
        %v412 = vld [vmem:[%s359 + $0x18] sm:$0xff]
        %v413 = vld [vmem:[%s359 + $0x20] sm:$0xff]
        %v414 = vld [vmem:[%s359 + $0x28] sm:$0xff]
        %v415 = vld [vmem:[%s359 + $0x30] sm:$0xff]
        %v416 = vld [vmem:[%s359 + $0x38] sm:$0xff]
        %v417 = vld [vmem:[%s359 + $0x40] sm:$0xff]
        %v418 = vld [vmem:[%s359 + $0x48] sm:$0xff]
        %v419 = vld [vmem:[%s359 + $0x50] sm:$0xff]
        %v420 = vld [vmem:[%s359 + $0x58] sm:$0xff]
        %v421 = vld [vmem:[%s359 + $0x60] sm:$0xff]
        %v422 = vld [vmem:[%s359 + $0x68] sm:$0xff]
        %v423 = vld [vmem:[%s359 + $0x70] sm:$0xff]
        %v424 = vld [vmem:[%s359 + $0x78] sm:$0xff]
        %v425 = vld [vmem:[%s359 + $0x80] sm:$0xff]
        %v426 = vld [vmem:[%s359 + $0x88] sm:$0xff]
        %v427 = vld [vmem:[%s359 + $0x90] sm:$0xff]
        %v428 = vld [vmem:[%s359 + $0x98] sm:$0xff]
        %v429 = vld [vmem:[%s359 + $0xa0] sm:$0xff]
        %v430 = vld [vmem:[%s359 + $0xa8] sm:$0xff]
        %v431 = vld [vmem:[%s359 + $0xb0] sm:$0xff]
        %v432 = vld [vmem:[%s359 + $0xb8] sm:$0xff]
        %v433 = vld [vmem:[%s359 + $0xc0] sm:$0xff]
        %v434 = vld [vmem:[%s359 + $0xc8] sm:$0xff]
        %v435 = vld [vmem:[%s359 + $0xd0] sm:$0xff]
        %v436 = vld [vmem:[%s359 + $0xd8] sm:$0xff]
        %v437 = vld [vmem:[%s359 + $0xe0] sm:$0xff]
        %v438 = vld [vmem:[%s359 + $0xe8] sm:$0xff]
        %v439 = vld [vmem:[%s359 + $0xf0] sm:$0xff]
        %v440 = vld [vmem:[%s359 + $0xf8] sm:$0xff]
        %v441 = vld [vmem:[%s359 + $0x100] sm:$0xff]
        %v442 = vld [vmem:[%s359 + $0x108] sm:$0xff]
        %v443 = vld [vmem:[%s359 + $0x110] sm:$0xff]
        %v444 = vld [vmem:[%s359 + $0x118] sm:$0xff]
        %v445 = vld [vmem:[%s359 + $0x120] sm:$0xff]
        %v446 = vld [vmem:[%s359 + $0x128] sm:$0xff]
        %v447 = vld [vmem:[%s359 + $0x130] sm:$0xff]
        %v448 = vld [vmem:[%s359 + $0x138] sm:$0xff]
        %v449 = vld [vmem:[%s359 + $0x140] sm:$0xff]
        %v450 = vld [vmem:[%s359 + $0x148] sm:$0xff]
        %v451 = vld [vmem:[%s359 + $0x150] sm:$0xff]
        %v452 = vld [vmem:[%s359 + $0x158] sm:$0xff]
        %v453 = vld [vmem:[%s359 + $0x160] sm:$0xff]
        %v454 = vld [vmem:[%s359 + $0x168] sm:$0xff]
        %v455 = vld [vmem:[%s359 + $0x170] sm:$0xff]
        %v456 = vld [vmem:[%s359 + $0x178] sm:$0xff]
        %v457 = vld [vmem:[%s359 + $0x180] sm:$0xff]
        %v458 = vld [vmem:[%s359 + $0x188] sm:$0xff]
        %v459 = vld [vmem:[%s359 + $0x190] sm:$0xff]
        %v460 = vld [vmem:[%s359 + $0x198] sm:$0xff]
        %v461 = vld [vmem:[%s359 + $0x1a0] sm:$0xff]
        %v462 = vld [vmem:[%s359 + $0x1a8] sm:$0xff]
        %v463 = vld [vmem:[%s359 + $0x1b0] sm:$0xff]
        %v464 = vld [vmem:[%s359 + $0x1b8] sm:$0xff]
        %v465 = vld [vmem:[%s359 + $0x1c0] sm:$0xff]
        %v466 = vld [vmem:[%s359 + $0x1c8] sm:$0xff]
        %v467 = vld [vmem:[%s359 + $0x1d0] sm:$0xff]
        %v468 = vld [vmem:[%s359 + $0x1d8] sm:$0xff]
        %v469 = vld [vmem:[%s359 + $0x1e0] sm:$0xff]
        %v470 = vld [vmem:[%s359 + $0x1e8] sm:$0xff]
        %v471 = vld [vmem:[%s359 + $0x1f0] sm:$0xff]
        %v472 = vld [vmem:[%s359 + $0x1f8] sm:$0xff]
        %v473 = vld [vmem:[%s359 + $0x200] sm:$0xff]
        %v474 = vld [vmem:[%s359 + $0x208] sm:$0xff]
        %v475 = vld [vmem:[%s359 + $0x210] sm:$0xff]
        %v476 = vld [vmem:[%s359 + $0x218] sm:$0xff]
        %v477 = vld [vmem:[%s359 + $0x220] sm:$0xff]
        %v478 = vld [vmem:[%s359 + $0x228] sm:$0xff]
        %v479 = vld [vmem:[%s359 + $0x230] sm:$0xff]
        %v480 = vld [vmem:[%s359 + $0x238] sm:$0xff]
        %v481 = vld [vmem:[%s359 + $0x240] sm:$0xff]
        %v482 = vld [vmem:[%s359 + $0x248] sm:$0xff]
        %v483 = vld [vmem:[%s359 + $0x250] sm:$0xff]
        %v484 = vld [vmem:[%s359 + $0x258] sm:$0xff]
        %v485 = vld [vmem:[%s359 + $0x260] sm:$0xff]
        %v486 = vld [vmem:[%s359 + $0x268] sm:$0xff]
        %v487 = vld [vmem:[%s359 + $0x270] sm:$0xff]
        %v488 = vld [vmem:[%s359 + $0x278] sm:$0xff]
        %v489 = vld [vmem:[%s359 + $0x280] sm:$0xff]
        %v490 = vld [vmem:[%s359 + $0x288] sm:$0xff]
        %v491 = vld [vmem:[%s359 + $0x290] sm:$0xff]
        %v492 = vld [vmem:[%s359 + $0x298] sm:$0xff]
        %v493 = vld [vmem:[%s359 + $0x2a0] sm:$0xff]
        %v494 = vld [vmem:[%s359 + $0x2a8] sm:$0xff]
        %v495 = vld [vmem:[%s359 + $0x2b0] sm:$0xff]
        %v496 = vld [vmem:[%s359 + $0x2b8] sm:$0xff]
        %v497 = vld [vmem:[%s359 + $0x2c0] sm:$0xff]
        %v498 = vld [vmem:[%s359 + $0x2c8] sm:$0xff]
        %v499 = vld [vmem:[%s359 + $0x2d0] sm:$0xff]
        %v500 = vld [vmem:[%s359 + $0x2d8] sm:$0xff]
        %v501 = vld [vmem:[%s359 + $0x2e0] sm:$0xff]
        %v502 = vld [vmem:[%s359 + $0x2e8] sm:$0xff]
        %v503 = vld [vmem:[%s359 + $0x2f0] sm:$0xff]
        %v504 = vld [vmem:[%s359 + $0x2f8] sm:$0xff]
        %v505 = vld [vmem:[#allocation4] sm:$0xff]
        %v506 = vld [vmem:[#allocation4 + $0x8] sm:$0xff]
        %v507 = vld [vmem:[#allocation4 + $0x10] sm:$0xff]
        %v508 = vld [vmem:[#allocation4 + $0x18] sm:$0xff]
        %v509 = vld [vmem:[#allocation4 + $0x20] sm:$0xff]
        %v510 = vld [vmem:[#allocation4 + $0x28] sm:$0xff]
        %v511 = vld [vmem:[#allocation4 + $0x30] sm:$0xff]
        %v512 = vld [vmem:[#allocation4 + $0x38] sm:$0xff]
        %v513 = vld [vmem:[#allocation4 + $0x40] sm:$0xff]
        %v514 = vld [vmem:[#allocation4 + $0x48] sm:$0xff]
        %v515 = vld [vmem:[#allocation4 + $0x50] sm:$0xff]
        %v516 = vld [vmem:[#allocation4 + $0x58] sm:$0xff]
        %v517 = vld [vmem:[#allocation4 + $0x60] sm:$0xff]
        %v518 = vld [vmem:[#allocation4 + $0x68] sm:$0xff]
        %v519 = vld [vmem:[#allocation4 + $0x70] sm:$0xff]
        %v520 = vld [vmem:[#allocation4 + $0x78] sm:$0xff]
        %v521 = vld [vmem:[#allocation4 + $0x80] sm:$0xff]
        %v522 = vld [vmem:[#allocation4 + $0x88] sm:$0xff]
        %v523 = vld [vmem:[#allocation4 + $0x90] sm:$0xff]
        %v524 = vld [vmem:[#allocation4 + $0x98] sm:$0xff]
        %v525 = vld [vmem:[#allocation4 + $0xa0] sm:$0xff]
        %v526 = vld [vmem:[#allocation4 + $0xa8] sm:$0xff]
        %v527 = vld [vmem:[#allocation4 + $0xb0] sm:$0xff]
        %v528 = vld [vmem:[#allocation4 + $0xb8] sm:$0xff]
        %v529 = vld [vmem:[#allocation4 + $0xc0] sm:$0xff]
        %v530 = vld [vmem:[#allocation4 + $0xc8] sm:$0xff]
        %v531 = vld [vmem:[#allocation4 + $0xd0] sm:$0xff]
        %v532 = vld [vmem:[#allocation4 + $0xd8] sm:$0xff]
        %v533 = vld [vmem:[#allocation4 + $0xe0] sm:$0xff]
        %v534 = vld [vmem:[#allocation4 + $0xe8] sm:$0xff]
        %v535 = vld [vmem:[#allocation4 + $0xf0] sm:$0xff]
        %v536 = vld [vmem:[#allocation4 + $0xf8] sm:$0xff]
        %v537 = vld [vmem:[#allocation4 + $0x100] sm:$0xff]
        %v538 = vld [vmem:[#allocation4 + $0x108] sm:$0xff]
        %v539 = vld [vmem:[#allocation4 + $0x110] sm:$0xff]
        %v540 = vld [vmem:[#allocation4 + $0x118] sm:$0xff]
        %v541 = vld [vmem:[#allocation4 + $0x120] sm:$0xff]
        %v542 = vld [vmem:[#allocation4 + $0x128] sm:$0xff]
        %v543 = vld [vmem:[#allocation4 + $0x130] sm:$0xff]
        %v544 = vld [vmem:[#allocation4 + $0x138] sm:$0xff]
        %v545 = vld [vmem:[#allocation4 + $0x140] sm:$0xff]
        %v546 = vld [vmem:[#allocation4 + $0x148] sm:$0xff]
        %v547 = vld [vmem:[#allocation4 + $0x150] sm:$0xff]
        %v548 = vld [vmem:[#allocation4 + $0x158] sm:$0xff]
        %v549 = vld [vmem:[#allocation4 + $0x160] sm:$0xff]
        %v550 = vld [vmem:[#allocation4 + $0x168] sm:$0xff]
        %v551 = vld [vmem:[#allocation4 + $0x170] sm:$0xff]
        %v552 = vld [vmem:[#allocation4 + $0x178] sm:$0xff]
        %v553 = vld [vmem:[%s2] sm:$0xff]
        %v554 = vld [vmem:[%s2 + $0x8] sm:$0xff]
        %v555 = vld [vmem:[%s2 + $0x10] sm:$0xff]
        %v556 = vld [vmem:[%s2 + $0x18] sm:$0xff]
        %v557 = vld [vmem:[%s2 + $0x20] sm:$0xff]
        %v558 = vld [vmem:[%s2 + $0x28] sm:$0xff]
        %v559 = vld [vmem:[%s2 + $0x30] sm:$0xff]
        %v560 = vld [vmem:[%s2 + $0x38] sm:$0xff]
        %v561 = vld [vmem:[%s2 + $0x40] sm:$0xff]
        %v562 = vld [vmem:[%s2 + $0x48] sm:$0xff]
        %v563 = vld [vmem:[%s2 + $0x50] sm:$0xff]
        %v564 = vld [vmem:[%s2 + $0x58] sm:$0xff]
        %v565 = vld [vmem:[%s2 + $0x60] sm:$0xff]
        %v566 = vld [vmem:[%s2 + $0x68] sm:$0xff]
        %v567 = vld [vmem:[%s2 + $0x70] sm:$0xff]
        %v568 = vld [vmem:[%s2 + $0x78] sm:$0xff]
        %570 = vset.pattern.permute.xlu0 0
        %571 = vperm.xlu0 %570, %v553
        %v572 = vpop.permute.xlu0 %571
        %575 = vset.pattern.permute.xlu0 0
        %576 = vperm.xlu0 %575, %v554
        %v577 = vpop.permute.xlu0 %576
        %580 = vset.pattern.permute.xlu0 0
        %581 = vperm.xlu0 %580, %v555
        %v582 = vpop.permute.xlu0 %581
        %585 = vset.pattern.permute.xlu0 0
        %586 = vperm.xlu0 %585, %v556
        %v587 = vpop.permute.xlu0 %586
        %590 = vset.pattern.permute.xlu0 0
        %591 = vperm.xlu0 %590, %v557
        %v592 = vpop.permute.xlu0 %591
        %595 = vset.pattern.permute.xlu0 0
        %596 = vperm.xlu0 %595, %v558
        %v597 = vpop.permute.xlu0 %596
        %600 = vset.pattern.permute.xlu0 0
        %601 = vperm.xlu0 %600, %v559
        %v602 = vpop.permute.xlu0 %601
        %605 = vset.pattern.permute.xlu0 0
        %606 = vperm.xlu0 %605, %v560
        %v607 = vpop.permute.xlu0 %606
        %610 = vset.pattern.permute.xlu0 0
        %611 = vperm.xlu0 %610, %v561
        %v612 = vpop.permute.xlu0 %611
        %615 = vset.pattern.permute.xlu0 0
        %616 = vperm.xlu0 %615, %v562
        %v617 = vpop.permute.xlu0 %616
        %620 = vset.pattern.permute.xlu0 0
        %621 = vperm.xlu0 %620, %v563
        %v622 = vpop.permute.xlu0 %621
        %625 = vset.pattern.permute.xlu0 0
        %626 = vperm.xlu0 %625, %v564
        %v627 = vpop.permute.xlu0 %626
        %630 = vset.pattern.permute.xlu0 0
        %631 = vperm.xlu0 %630, %v565
        %v632 = vpop.permute.xlu0 %631
        %635 = vset.pattern.permute.xlu0 0
        %636 = vperm.xlu0 %635, %v566
        %v637 = vpop.permute.xlu0 %636
        %640 = vset.pattern.permute.xlu0 0
        %641 = vperm.xlu0 %640, %v567
        %v642 = vpop.permute.xlu0 %641
        %645 = vset.pattern.permute.xlu0 0
        %646 = vperm.xlu0 %645, %v568
        %v647 = vpop.permute.xlu0 %646
        %649 = vmatprep.subr.mxu0 %v440
        %650 = vmatpush1.msra.mxu0 %v439
        %651 = vmatprep.subr.mxu0 %v438
        %652 = vmatpush1.msra.mxu0 %v437
        %653 = vmatprep.subr.mxu0 %v436
        %654 = vmatpush1.msra.mxu0 %v435
        %655 = vmatprep.subr.mxu0 %v434
        %656 = vmatpush1.msra.mxu0 %v433
        %657 = vmatprep.subr.mxu0 %v432
        %658 = vmatpush1.msra.mxu0 %v431
        %659 = vmatprep.subr.mxu0 %v430
        %660 = vmatpush1.msra.mxu0 %v429
        %661 = vmatprep.subr.mxu0 %v428
        %662 = vmatpush1.msra.mxu0 %v427
        %663 = vmatprep.subr.mxu0 %v426
        %664 = vmatpush1.msra.mxu0 %v425
        %665 = vmatprep.subr.mxu0 %v424
        %666 = vmatpush1.msra.mxu0 %v423
        %667 = vmatprep.subr.mxu0 %v422
        %668 = vmatpush1.msra.mxu0 %v421
        %669 = vmatprep.subr.mxu0 %v420
        %670 = vmatpush1.msra.mxu0 %v419
        %671 = vmatprep.subr.mxu0 %v418
        %672 = vmatpush1.msra.mxu0 %v417
        %673 = vmatprep.subr.mxu0 %v416
        %674 = vmatpush1.msra.mxu0 %v415
        %675 = vmatprep.subr.mxu0 %v414
        %676 = vmatpush1.msra.mxu0 %v413
        %677 = vmatprep.subr.mxu0 %v412
        %678 = vmatpush1.msra.mxu0 %v411
        %679 = vmatprep.subr.mxu0 %v410
        %680 = vmatpush1.msra.mxu0 %v409
        %681 = vmatprep.subr.mxu0 %v472
        %682 = vmatpush2.msra.mxu0 %v471
        %683 = vmatprep.subr.mxu0 %v470
        %684 = vmatpush2.msra.mxu0 %v469
        %685 = vmatprep.subr.mxu0 %v468
        %686 = vmatpush2.msra.mxu0 %v467
        %687 = vmatprep.subr.mxu0 %v466
        %688 = vmatpush2.msra.mxu0 %v465
        %689 = vmatprep.subr.mxu0 %v464
        %690 = vmatpush2.msra.mxu0 %v463
        %691 = vmatprep.subr.mxu0 %v462
        %692 = vmatpush2.msra.mxu0 %v461
        %693 = vmatprep.subr.mxu0 %v460
        %694 = vmatpush2.msra.mxu0 %v459
        %695 = vmatprep.subr.mxu0 %v458
        %696 = vmatpush2.msra.mxu0 %v457
        %697 = vmatprep.subr.mxu0 %v456
        %698 = vmatpush2.msra.mxu0 %v455
        %699 = vmatprep.subr.mxu0 %v454
        %700 = vmatpush2.msra.mxu0 %v453
        %701 = vmatprep.subr.mxu0 %v452
        %702 = vmatpush2.msra.mxu0 %v451
        %703 = vmatprep.subr.mxu0 %v450
        %704 = vmatpush2.msra.mxu0 %v449
        %705 = vmatprep.subr.mxu0 %v448
        %706 = vmatpush2.msra.mxu0 %v447
        %707 = vmatprep.subr.mxu0 %v446
        %708 = vmatpush2.msra.mxu0 %v445
        %709 = vmatprep.subr.mxu0 %v444
        %710 = vmatpush2.msra.mxu0 %v443
        %711 = vmatprep.subr.mxu0 %v442
        %712 = vmatpush2.msra.mxu0 %v441
        %713 = vmatprep.mubr.f32.mxu0 %v506
        %714 = vmatmul.mubr.f32.gmra.mxu0 %v505
        %v715 = vpop.f32.mrf.mxu0
        %v716 = vadd.f32 %v572, %v715
        %v717 = vpop.f32.mrf.mxu0
        %v718 = vadd.f32 %v572, %v717
        %719 = vmatprep.mubr.f32.mxu0 %v509
        %720 = vmatmul.mubr.f32.gmra.mxu0 %v508
        %v721 = vpop.f32.mrf.mxu0
        %v722 = vadd.f32 %v577, %v721
        %v723 = vpop.f32.mrf.mxu0
        %v724 = vadd.f32 %v577, %v723
        %725 = vmatprep.mubr.f32.mxu0 %v512
        %726 = vmatmul.mubr.f32.gmra.mxu0 %v511
        %v727 = vpop.f32.mrf.mxu0
        %v728 = vadd.f32 %v582, %v727
        %v729 = vpop.f32.mrf.mxu0
        %v730 = vadd.f32 %v582, %v729
        %731 = vmatprep.mubr.f32.mxu0 %v515
        %732 = vmatmul.mubr.f32.gmra.mxu0 %v514
        %v733 = vpop.f32.mrf.mxu0
        %v734 = vadd.f32 %v587, %v733
        %v735 = vpop.f32.mrf.mxu0
        %v736 = vadd.f32 %v587, %v735
        %737 = vmatprep.mubr.f32.mxu0 %v518
        %738 = vmatmul.mubr.f32.gmra.mxu0 %v517
        %v739 = vpop.f32.mrf.mxu0
        %v740 = vadd.f32 %v592, %v739
        %v741 = vpop.f32.mrf.mxu0
        %v742 = vadd.f32 %v592, %v741
        %743 = vmatprep.mubr.f32.mxu0 %v521
        %744 = vmatmul.mubr.f32.gmra.mxu0 %v520
        %v745 = vpop.f32.mrf.mxu0
        %v746 = vadd.f32 %v597, %v745
        %v747 = vpop.f32.mrf.mxu0
        %v748 = vadd.f32 %v597, %v747
        %749 = vmatprep.mubr.f32.mxu0 %v524
        %750 = vmatmul.mubr.f32.gmra.mxu0 %v523
        %v751 = vpop.f32.mrf.mxu0
        %v752 = vadd.f32 %v602, %v751
        %v753 = vpop.f32.mrf.mxu0
        %v754 = vadd.f32 %v602, %v753
        %755 = vmatprep.mubr.f32.mxu0 %v527
        %756 = vmatmul.mubr.f32.gmra.mxu0 %v526
        %v757 = vpop.f32.mrf.mxu0
        %v758 = vadd.f32 %v607, %v757
        %v759 = vpop.f32.mrf.mxu0
        %v760 = vadd.f32 %v607, %v759
        %761 = vmatprep.mubr.f32.mxu0 %v530
        %762 = vmatmul.mubr.f32.gmra.mxu0 %v529
        %v763 = vpop.f32.mrf.mxu0
        %v764 = vadd.f32 %v612, %v763
        %v765 = vpop.f32.mrf.mxu0
        %v766 = vadd.f32 %v612, %v765
        %767 = vmatprep.mubr.f32.mxu0 %v533
        %768 = vmatmul.mubr.f32.gmra.mxu0 %v532
        %v769 = vpop.f32.mrf.mxu0
        %v770 = vadd.f32 %v617, %v769
        %v771 = vpop.f32.mrf.mxu0
        %v772 = vadd.f32 %v617, %v771
        %773 = vmatprep.mubr.f32.mxu0 %v536
        %774 = vmatmul.mubr.f32.gmra.mxu0 %v535
        %v775 = vpop.f32.mrf.mxu0
        %v776 = vadd.f32 %v622, %v775
        %v777 = vpop.f32.mrf.mxu0
        %v778 = vadd.f32 %v622, %v777
        %779 = vmatprep.mubr.f32.mxu0 %v539
        %780 = vmatmul.mubr.f32.gmra.mxu0 %v538
        %v781 = vpop.f32.mrf.mxu0
        %v782 = vadd.f32 %v627, %v781
        %v783 = vpop.f32.mrf.mxu0
        %v784 = vadd.f32 %v627, %v783
        %785 = vmatprep.mubr.f32.mxu0 %v542
        %786 = vmatmul.mubr.f32.gmra.mxu0 %v541
        %v787 = vpop.f32.mrf.mxu0
        %v788 = vadd.f32 %v632, %v787
        %v789 = vpop.f32.mrf.mxu0
        %v790 = vadd.f32 %v632, %v789
        %791 = vmatprep.mubr.f32.mxu0 %v545
        %792 = vmatmul.mubr.f32.gmra.mxu0 %v544
        %v793 = vpop.f32.mrf.mxu0
        %v794 = vadd.f32 %v637, %v793
        %v795 = vpop.f32.mrf.mxu0
        %v796 = vadd.f32 %v637, %v795
        %797 = vmatprep.mubr.f32.mxu0 %v548
        %798 = vmatmul.mubr.f32.gmra.mxu0 %v547
        %v799 = vpop.f32.mrf.mxu0
        %v800 = vadd.f32 %v642, %v799
        %v801 = vpop.f32.mrf.mxu0
        %v802 = vadd.f32 %v642, %v801
        %803 = vmatprep.mubr.f32.mxu0 %v551
        %804 = vmatmul.mubr.f32.gmra.mxu0 %v550
        %v805 = vpop.f32.mrf.mxu0
        %v806 = vadd.f32 %v647, %v805
        %v807 = vpop.f32.mrf.mxu0
        %v808 = vadd.f32 %v647, %v807
        %809 = vdwg.mxu0
        %810 = vmatprep.subr.mxu0 %v504
        %811 = vmatpush1.msra.mxu0 %v503
        %812 = vmatprep.subr.mxu0 %v502
        %813 = vmatpush1.msra.mxu0 %v501
        %814 = vmatprep.subr.mxu0 %v500
        %815 = vmatpush1.msra.mxu0 %v499
        %816 = vmatprep.subr.mxu0 %v498
        %817 = vmatpush1.msra.mxu0 %v497
        %818 = vmatprep.subr.mxu0 %v496
        %819 = vmatpush1.msra.mxu0 %v495
        %820 = vmatprep.subr.mxu0 %v494
        %821 = vmatpush1.msra.mxu0 %v493
        %822 = vmatprep.subr.mxu0 %v492
        %823 = vmatpush1.msra.mxu0 %v491
        %824 = vmatprep.subr.mxu0 %v490
        %825 = vmatpush1.msra.mxu0 %v489
        %826 = vmatprep.subr.mxu0 %v488
        %827 = vmatpush1.msra.mxu0 %v487
        %828 = vmatprep.subr.mxu0 %v486
        %829 = vmatpush1.msra.mxu0 %v485
        %830 = vmatprep.subr.mxu0 %v484
        %831 = vmatpush1.msra.mxu0 %v483
        %832 = vmatprep.subr.mxu0 %v482
        %833 = vmatpush1.msra.mxu0 %v481
        %834 = vmatprep.subr.mxu0 %v480
        %835 = vmatpush1.msra.mxu0 %v479
        %836 = vmatprep.subr.mxu0 %v478
        %837 = vmatpush1.msra.mxu0 %v477
        %838 = vmatprep.subr.mxu0 %v476
        %839 = vmatpush1.msra.mxu0 %v475
        %840 = vmatprep.subr.mxu0 %v474
        %841 = vmatpush1.msra.mxu0 %v473
        %842 = vmatprep.subr.mxu0 0.0
        %843 = vmatpush2.msra.mxu0 0.0
        %844 = vmatprep.subr.mxu0 0.0
        %845 = vmatpush2.msra.mxu0 0.0
        %846 = vmatprep.subr.mxu0 0.0
        %847 = vmatpush2.msra.mxu0 0.0
        %848 = vmatprep.subr.mxu0 0.0
        %849 = vmatpush2.msra.mxu0 0.0
        %850 = vmatprep.subr.mxu0 0.0
        %851 = vmatpush2.msra.mxu0 0.0
        %852 = vmatprep.subr.mxu0 0.0
        %853 = vmatpush2.msra.mxu0 0.0
        %854 = vmatprep.subr.mxu0 0.0
        %855 = vmatpush2.msra.mxu0 0.0
        %856 = vmatprep.subr.mxu0 0.0
        %857 = vmatpush2.msra.mxu0 0.0
        %858 = vmatprep.subr.mxu0 0.0
        %859 = vmatpush2.msra.mxu0 0.0
        %860 = vmatprep.subr.mxu0 0.0
        %861 = vmatpush2.msra.mxu0 0.0
        %862 = vmatprep.subr.mxu0 0.0
        %863 = vmatpush2.msra.mxu0 0.0
        %864 = vmatprep.subr.mxu0 0.0
        %865 = vmatpush2.msra.mxu0 0.0
        %866 = vmatprep.subr.mxu0 0.0
        %867 = vmatpush2.msra.mxu0 0.0
        %868 = vmatprep.subr.mxu0 0.0
        %869 = vmatpush2.msra.mxu0 0.0
        %870 = vmatprep.subr.mxu0 0.0
        %871 = vmatpush2.msra.mxu0 0.0
        %872 = vmatprep.subr.mxu0 0.0
        %873 = vmatpush2.msra.mxu0 0.0
        %874 = vmatprep.mubr.f32.mxu0 0.0
        %875 = vmatmul.mubr.f32.gmra.mxu0 %v507
        %v876 = vpop.f32.mrf.mxu0
        %v877 = vadd.f32 %v716, %v876
        %v878 = vpop.f32.mrf.mxu0
        %v879 = vadd.f32 %v718, %v878
        %880 = vmatprep.mubr.f32.mxu0 0.0
        %881 = vmatmul.mubr.f32.gmra.mxu0 %v510
        %v882 = vpop.f32.mrf.mxu0
        %v883 = vadd.f32 %v722, %v882
        %v884 = vpop.f32.mrf.mxu0
        %v885 = vadd.f32 %v724, %v884
        %886 = vmatprep.mubr.f32.mxu0 0.0
        %887 = vmatmul.mubr.f32.gmra.mxu0 %v513
        %v888 = vpop.f32.mrf.mxu0
        %v889 = vadd.f32 %v728, %v888
        %v890 = vpop.f32.mrf.mxu0
        %v891 = vadd.f32 %v730, %v890
        %892 = vmatprep.mubr.f32.mxu0 0.0
        %893 = vmatmul.mubr.f32.gmra.mxu0 %v516
        %v894 = vpop.f32.mrf.mxu0
        %v895 = vadd.f32 %v734, %v894
        %v896 = vpop.f32.mrf.mxu0
        %v897 = vadd.f32 %v736, %v896
        %898 = vmatprep.mubr.f32.mxu0 0.0
        %899 = vmatmul.mubr.f32.gmra.mxu0 %v519
        %v900 = vpop.f32.mrf.mxu0
        %v901 = vadd.f32 %v740, %v900
        %v902 = vpop.f32.mrf.mxu0
        %v903 = vadd.f32 %v742, %v902
        %904 = vmatprep.mubr.f32.mxu0 0.0
        %905 = vmatmul.mubr.f32.gmra.mxu0 %v522
        %v906 = vpop.f32.mrf.mxu0
        %v907 = vadd.f32 %v746, %v906
        %v908 = vpop.f32.mrf.mxu0
        %v909 = vadd.f32 %v748, %v908
        %910 = vmatprep.mubr.f32.mxu0 0.0
        %911 = vmatmul.mubr.f32.gmra.mxu0 %v525
        %v912 = vpop.f32.mrf.mxu0
        %v913 = vadd.f32 %v752, %v912
        %v914 = vpop.f32.mrf.mxu0
        %v915 = vadd.f32 %v754, %v914
        %916 = vmatprep.mubr.f32.mxu0 0.0
        %917 = vmatmul.mubr.f32.gmra.mxu0 %v528
        %v918 = vpop.f32.mrf.mxu0
        %v919 = vadd.f32 %v758, %v918
        %v920 = vpop.f32.mrf.mxu0
        %v921 = vadd.f32 %v760, %v920
        %922 = vmatprep.mubr.f32.mxu0 0.0
        %923 = vmatmul.mubr.f32.gmra.mxu0 %v531
        %v924 = vpop.f32.mrf.mxu0
        %v925 = vadd.f32 %v764, %v924
        %v926 = vpop.f32.mrf.mxu0
        %v927 = vadd.f32 %v766, %v926
        %928 = vmatprep.mubr.f32.mxu0 0.0
        %929 = vmatmul.mubr.f32.gmra.mxu0 %v534
        %v930 = vpop.f32.mrf.mxu0
        %v931 = vadd.f32 %v770, %v930
        %v932 = vpop.f32.mrf.mxu0
        %v933 = vadd.f32 %v772, %v932
        %934 = vmatprep.mubr.f32.mxu0 0.0
        %935 = vmatmul.mubr.f32.gmra.mxu0 %v537
        %v936 = vpop.f32.mrf.mxu0
        %v937 = vadd.f32 %v776, %v936
        %v938 = vpop.f32.mrf.mxu0
        %v939 = vadd.f32 %v778, %v938
        %940 = vmatprep.mubr.f32.mxu0 0.0
        %941 = vmatmul.mubr.f32.gmra.mxu0 %v540
        %v942 = vpop.f32.mrf.mxu0
        %v943 = vadd.f32 %v782, %v942
        %v944 = vpop.f32.mrf.mxu0
        %v945 = vadd.f32 %v784, %v944
        %946 = vmatprep.mubr.f32.mxu0 0.0
        %947 = vmatmul.mubr.f32.gmra.mxu0 %v543
        %v948 = vpop.f32.mrf.mxu0
        %v949 = vadd.f32 %v788, %v948
        %v950 = vpop.f32.mrf.mxu0
        %v951 = vadd.f32 %v790, %v950
        %952 = vmatprep.mubr.f32.mxu0 0.0
        %953 = vmatmul.mubr.f32.gmra.mxu0 %v546
        %v954 = vpop.f32.mrf.mxu0
        %v955 = vadd.f32 %v794, %v954
        %v956 = vpop.f32.mrf.mxu0
        %v957 = vadd.f32 %v796, %v956
        %958 = vmatprep.mubr.f32.mxu0 0.0
        %959 = vmatmul.mubr.f32.gmra.mxu0 %v549
        %v960 = vpop.f32.mrf.mxu0
        %v961 = vadd.f32 %v800, %v960
        %v962 = vpop.f32.mrf.mxu0
        %v963 = vadd.f32 %v802, %v962
        %964 = vmatprep.mubr.f32.mxu0 0.0
        %965 = vmatmul.mubr.f32.gmra.mxu0 %v552
        %v966 = vpop.f32.mrf.mxu0
        %v967 = vadd.f32 %v806, %v966
        %v968 = vpop.f32.mrf.mxu0
        %v969 = vadd.f32 %v808, %v968
        %970 = vdwg.mxu0
        %v971 = vmax.f32 %v877, 0.0
        %v972 = vmax.f32 %v879, 0.0
        %v973 = vmax.f32 %v883, 0.0
        %v974 = vmax.f32 %v885, 0.0
        %v975 = vmax.f32 %v889, 0.0
        %v976 = vmax.f32 %v891, 0.0
        %v977 = vmax.f32 %v895, 0.0
        %v978 = vmax.f32 %v897, 0.0
        %v979 = vmax.f32 %v901, 0.0
        %v980 = vmax.f32 %v903, 0.0
        %v981 = vmax.f32 %v907, 0.0
        %v982 = vmax.f32 %v909, 0.0
        %v983 = vmax.f32 %v913, 0.0
        %v984 = vmax.f32 %v915, 0.0
        %v985 = vmax.f32 %v919, 0.0
        %v986 = vmax.f32 %v921, 0.0
        %v987 = vmax.f32 %v925, 0.0
        %v988 = vmax.f32 %v927, 0.0
        %v989 = vmax.f32 %v931, 0.0
        %v990 = vmax.f32 %v933, 0.0
        %v991 = vmax.f32 %v937, 0.0
        %v992 = vmax.f32 %v939, 0.0
        %v993 = vmax.f32 %v943, 0.0
        %v994 = vmax.f32 %v945, 0.0
        %v995 = vmax.f32 %v949, 0.0
        %v996 = vmax.f32 %v951, 0.0
        %v997 = vmax.f32 %v955, 0.0
        %v998 = vmax.f32 %v957, 0.0
        %v999 = vmax.f32 %v961, 0.0
        %v1000 = vmax.f32 %v963, 0.0
        %v1001 = vmax.f32 %v967, 0.0
        %v1002 = vmax.f32 %v969, 0.0
        %v1003 = vld [vmem:[%s3] sm:$0xff]
        %v1004 = vld [vmem:[%s3 + $0x8] sm:$0xff]
        %v1005 = vld [vmem:[%s3 + $0x10] sm:$0xff]
        %v1006 = vld [vmem:[%s3 + $0x18] sm:$0xff]
        %v1007 = vld [vmem:[%s3 + $0x20] sm:$0xff]
        %v1008 = vld [vmem:[%s3 + $0x28] sm:$0xff]
        %v1009 = vld [vmem:[%s3 + $0x30] sm:$0xff]
        %v1010 = vld [vmem:[%s3 + $0x38] sm:$0xff]
        %v1011 = vld [vmem:[%s4] sm:$0xff]
        %v1012 = vld [vmem:[%s4 + $0x8] sm:$0xff]
        %v1013 = vld [vmem:[%s4 + $0x10] sm:$0xff]
        %v1014 = vld [vmem:[%s4 + $0x18] sm:$0xff]
        %v1015 = vld [vmem:[%s4 + $0x20] sm:$0xff]
        %v1016 = vld [vmem:[%s4 + $0x28] sm:$0xff]
        %v1017 = vld [vmem:[%s4 + $0x30] sm:$0xff]
        %v1018 = vld [vmem:[%s4 + $0x38] sm:$0xff]
        %1020 = vset.pattern.permute.xlu0 0
        %1021 = vperm.xlu0 %1020, %v1011
        %v1022 = vpop.permute.xlu0 %1021
        %1025 = vset.pattern.permute.xlu0 0
        %1026 = vperm.xlu0 %1025, %v1012
        %v1027 = vpop.permute.xlu0 %1026
        %1030 = vset.pattern.permute.xlu0 0
        %1031 = vperm.xlu0 %1030, %v1013
        %v1032 = vpop.permute.xlu0 %1031
        %1035 = vset.pattern.permute.xlu0 0
        %1036 = vperm.xlu0 %1035, %v1014
        %v1037 = vpop.permute.xlu0 %1036
        %1040 = vset.pattern.permute.xlu0 0
        %1041 = vperm.xlu0 %1040, %v1015
        %v1042 = vpop.permute.xlu0 %1041
        %1045 = vset.pattern.permute.xlu0 0
        %1046 = vperm.xlu0 %1045, %v1016
        %v1047 = vpop.permute.xlu0 %1046
        %1050 = vset.pattern.permute.xlu0 0
        %1051 = vperm.xlu0 %1050, %v1017
        %v1052 = vpop.permute.xlu0 %1051
        %1055 = vset.pattern.permute.xlu0 0
        %1056 = vperm.xlu0 %1055, %v1018
        %v1057 = vpop.permute.xlu0 %1056
        %1059 = vmatprep.subr.mxu0 %v1002
        %1060 = vmatpush1.msra.mxu0 %v1001
        %1061 = vmatprep.subr.mxu0 %v1000
        %1062 = vmatpush1.msra.mxu0 %v999
        %1063 = vmatprep.subr.mxu0 %v998
        %1064 = vmatpush1.msra.mxu0 %v997
        %1065 = vmatprep.subr.mxu0 %v996
        %1066 = vmatpush1.msra.mxu0 %v995
        %1067 = vmatprep.subr.mxu0 %v994
        %1068 = vmatpush1.msra.mxu0 %v993
        %1069 = vmatprep.subr.mxu0 %v992
        %1070 = vmatpush1.msra.mxu0 %v991
        %1071 = vmatprep.subr.mxu0 %v990
        %1072 = vmatpush1.msra.mxu0 %v989
        %1073 = vmatprep.subr.mxu0 %v988
        %1074 = vmatpush1.msra.mxu0 %v987
        %1075 = vmatprep.subr.mxu0 %v986
        %1076 = vmatpush1.msra.mxu0 %v985
        %1077 = vmatprep.subr.mxu0 %v984
        %1078 = vmatpush1.msra.mxu0 %v983
        %1079 = vmatprep.subr.mxu0 %v982
        %1080 = vmatpush1.msra.mxu0 %v981
        %1081 = vmatprep.subr.mxu0 %v980
        %1082 = vmatpush1.msra.mxu0 %v979
        %1083 = vmatprep.subr.mxu0 %v978
        %1084 = vmatpush1.msra.mxu0 %v977
        %1085 = vmatprep.subr.mxu0 %v976
        %1086 = vmatpush1.msra.mxu0 %v975
        %1087 = vmatprep.subr.mxu0 %v974
        %1088 = vmatpush1.msra.mxu0 %v973
        %1089 = vmatprep.subr.mxu0 %v972
        %1090 = vmatpush1.msra.mxu0 %v971
        %1091 = vmatprep.subr.mxu0 0.0
        %1092 = vmatpush2.msra.mxu0 0.0
        %1093 = vmatprep.subr.mxu0 0.0
        %1094 = vmatpush2.msra.mxu0 0.0
        %1095 = vmatprep.subr.mxu0 0.0
        %1096 = vmatpush2.msra.mxu0 0.0
        %1097 = vmatprep.subr.mxu0 0.0
        %1098 = vmatpush2.msra.mxu0 0.0
        %1099 = vmatprep.subr.mxu0 0.0
        %1100 = vmatpush2.msra.mxu0 0.0
        %1101 = vmatprep.subr.mxu0 0.0
        %1102 = vmatpush2.msra.mxu0 0.0
        %1103 = vmatprep.subr.mxu0 0.0
        %1104 = vmatpush2.msra.mxu0 0.0
        %1105 = vmatprep.subr.mxu0 0.0
        %1106 = vmatpush2.msra.mxu0 0.0
        %1107 = vmatprep.subr.mxu0 0.0
        %1108 = vmatpush2.msra.mxu0 0.0
        %1109 = vmatprep.subr.mxu0 0.0
        %1110 = vmatpush2.msra.mxu0 0.0
        %1111 = vmatprep.subr.mxu0 0.0
        %1112 = vmatpush2.msra.mxu0 0.0
        %1113 = vmatprep.subr.mxu0 0.0
        %1114 = vmatpush2.msra.mxu0 0.0
        %1115 = vmatprep.subr.mxu0 0.0
        %1116 = vmatpush2.msra.mxu0 0.0
        %1117 = vmatprep.subr.mxu0 0.0
        %1118 = vmatpush2.msra.mxu0 0.0
        %1119 = vmatprep.subr.mxu0 0.0
        %1120 = vmatpush2.msra.mxu0 0.0
        %1121 = vmatprep.subr.mxu0 0.0
        %1122 = vmatpush2.msra.mxu0 0.0
        %1123 = vmatprep.mubr.f32.mxu0 0.0
        %1124 = vmatmul.mubr.f32.gmra.mxu0 %v1003
        %v1125 = vpop.f32.mrf.mxu0
        %v1126 = vadd.f32 %v1022, %v1125
        %v1127 = vpop.f32.mrf.mxu0
        %v1128 = vadd.f32 %v1022, %v1127
        %1129 = vmatprep.mubr.f32.mxu0 0.0
        %1130 = vmatmul.mubr.f32.gmra.mxu0 %v1004
        %v1131 = vpop.f32.mrf.mxu0
        %v1132 = vadd.f32 %v1027, %v1131
        %v1133 = vpop.f32.mrf.mxu0
        %v1134 = vadd.f32 %v1027, %v1133
        %1135 = vmatprep.mubr.f32.mxu0 0.0
        %1136 = vmatmul.mubr.f32.gmra.mxu0 %v1005
        %v1137 = vpop.f32.mrf.mxu0
        %v1138 = vadd.f32 %v1032, %v1137
        %v1139 = vpop.f32.mrf.mxu0
        %v1140 = vadd.f32 %v1032, %v1139
        %1141 = vmatprep.mubr.f32.mxu0 0.0
        %1142 = vmatmul.mubr.f32.gmra.mxu0 %v1006
        %v1143 = vpop.f32.mrf.mxu0
        %v1144 = vadd.f32 %v1037, %v1143
        %v1145 = vpop.f32.mrf.mxu0
        %v1146 = vadd.f32 %v1037, %v1145
        %1147 = vmatprep.mubr.f32.mxu0 0.0
        %1148 = vmatmul.mubr.f32.gmra.mxu0 %v1007
        %v1149 = vpop.f32.mrf.mxu0
        %v1150 = vadd.f32 %v1042, %v1149
        %v1151 = vpop.f32.mrf.mxu0
        %v1152 = vadd.f32 %v1042, %v1151
        %1153 = vmatprep.mubr.f32.mxu0 0.0
        %1154 = vmatmul.mubr.f32.gmra.mxu0 %v1008
        %v1155 = vpop.f32.mrf.mxu0
        %v1156 = vadd.f32 %v1047, %v1155
        %v1157 = vpop.f32.mrf.mxu0
        %v1158 = vadd.f32 %v1047, %v1157
        %1159 = vmatprep.mubr.f32.mxu0 0.0
        %1160 = vmatmul.mubr.f32.gmra.mxu0 %v1009
        %v1161 = vpop.f32.mrf.mxu0
        %v1162 = vadd.f32 %v1052, %v1161
        %v1163 = vpop.f32.mrf.mxu0
        %v1164 = vadd.f32 %v1052, %v1163
        %1165 = vmatprep.mubr.f32.mxu0 0.0
        %1166 = vmatmul.mubr.f32.gmra.mxu0 %v1010
        %v1167 = vpop.f32.mrf.mxu0
        %v1168 = vadd.f32 %v1057, %v1167
        %v1169 = vpop.f32.mrf.mxu0
        %v1170 = vadd.f32 %v1057, %v1169
        %1171 = vdwg.mxu0
        %v1172 = vmax.f32 %v1126, 0.0
        %v1173 = vmax.f32 %v1128, 0.0
        %v1174 = vmax.f32 %v1132, 0.0
        %v1175 = vmax.f32 %v1134, 0.0
        %v1176 = vmax.f32 %v1138, 0.0
        %v1177 = vmax.f32 %v1140, 0.0
        %v1178 = vmax.f32 %v1144, 0.0
        %v1179 = vmax.f32 %v1146, 0.0
        %v1180 = vmax.f32 %v1150, 0.0
        %v1181 = vmax.f32 %v1152, 0.0
        %v1182 = vmax.f32 %v1156, 0.0
        %v1183 = vmax.f32 %v1158, 0.0
        %v1184 = vmax.f32 %v1162, 0.0
        %v1185 = vmax.f32 %v1164, 0.0
        %v1186 = vmax.f32 %v1168, 0.0
        %v1187 = vmax.f32 %v1170, 0.0
        %v1188 = vld [vmem:[%s5] sm:$0xff]
        %v1189 = vld [vmem:[%s5 + $0x8] sm:$0xff]
        %v1190 = vld [vmem:[%s5 + $0x10] sm:$0xff]
        %v1191 = vld [vmem:[%s5 + $0x18] sm:$0xff]
        %v1192 = vld [vmem:[%s6] sm:$0xff]
        %v1193 = vld [vmem:[%s6 + $0x8] sm:$0xff]
        %v1194 = vld [vmem:[%s6 + $0x10] sm:$0xff]
        %v1195 = vld [vmem:[%s6 + $0x18] sm:$0xff]
        %1197 = vset.pattern.permute.xlu0 0
        %1198 = vperm.xlu0 %1197, %v1192
        %v1199 = vpop.permute.xlu0 %1198
        %1202 = vset.pattern.permute.xlu0 0
        %1203 = vperm.xlu0 %1202, %v1193
        %v1204 = vpop.permute.xlu0 %1203
        %1207 = vset.pattern.permute.xlu0 0
        %1208 = vperm.xlu0 %1207, %v1194
        %v1209 = vpop.permute.xlu0 %1208
        %1212 = vset.pattern.permute.xlu0 0
        %1213 = vperm.xlu0 %1212, %v1195
        %v1214 = vpop.permute.xlu0 %1213
        %vm1216 = vcmask 523264
        %v1218 = vsel %vm1216, %v1188, 0
        %v1221 = vsel %vm1216, %v1189, 0
        %v1224 = vsel %vm1216, %v1190, 0
        %v1227 = vsel %vm1216, %v1191, 0
        %1229 = vmatprep.subr.mxu0 0.0
        %1230 = vmatpush1.msra.mxu0 0.0
        %1231 = vmatprep.subr.mxu0 0.0
        %1232 = vmatpush1.msra.mxu0 0.0
        %1233 = vmatprep.subr.mxu0 0.0
        %1234 = vmatpush1.msra.mxu0 0.0
        %1235 = vmatprep.subr.mxu0 0.0
        %1236 = vmatpush1.msra.mxu0 0.0
        %1237 = vmatprep.subr.mxu0 0.0
        %1238 = vmatpush1.msra.mxu0 0.0
        %1239 = vmatprep.subr.mxu0 0.0
        %1240 = vmatpush1.msra.mxu0 0.0
        %1241 = vmatprep.subr.mxu0 0.0
        %1242 = vmatpush1.msra.mxu0 0.0
        %1243 = vmatprep.subr.mxu0 0.0
        %1244 = vmatpush1.msra.mxu0 0.0
        %1245 = vmatprep.subr.mxu0 %v1187
        %1246 = vmatpush1.msra.mxu0 %v1186
        %1247 = vmatprep.subr.mxu0 %v1185
        %1248 = vmatpush1.msra.mxu0 %v1184
        %1249 = vmatprep.subr.mxu0 %v1183
        %1250 = vmatpush1.msra.mxu0 %v1182
        %1251 = vmatprep.subr.mxu0 %v1181
        %1252 = vmatpush1.msra.mxu0 %v1180
        %1253 = vmatprep.subr.mxu0 %v1179
        %1254 = vmatpush1.msra.mxu0 %v1178
        %1255 = vmatprep.subr.mxu0 %v1177
        %1256 = vmatpush1.msra.mxu0 %v1176
        %1257 = vmatprep.subr.mxu0 %v1175
        %1258 = vmatpush1.msra.mxu0 %v1174
        %1259 = vmatprep.subr.mxu0 %v1173
        %1260 = vmatpush1.msra.mxu0 %v1172
        %1261 = vmatprep.subr.mxu0 0.0
        %1262 = vmatpush2.msra.mxu0 0.0
        %1263 = vmatprep.subr.mxu0 0.0
        %1264 = vmatpush2.msra.mxu0 0.0
        %1265 = vmatprep.subr.mxu0 0.0
        %1266 = vmatpush2.msra.mxu0 0.0
        %1267 = vmatprep.subr.mxu0 0.0
        %1268 = vmatpush2.msra.mxu0 0.0
        %1269 = vmatprep.subr.mxu0 0.0
        %1270 = vmatpush2.msra.mxu0 0.0
        %1271 = vmatprep.subr.mxu0 0.0
        %1272 = vmatpush2.msra.mxu0 0.0
        %1273 = vmatprep.subr.mxu0 0.0
        %1274 = vmatpush2.msra.mxu0 0.0
        %1275 = vmatprep.subr.mxu0 0.0
        %1276 = vmatpush2.msra.mxu0 0.0
        %1277 = vmatprep.subr.mxu0 0.0
        %1278 = vmatpush2.msra.mxu0 0.0
        %1279 = vmatprep.subr.mxu0 0.0
        %1280 = vmatpush2.msra.mxu0 0.0
        %1281 = vmatprep.subr.mxu0 0.0
        %1282 = vmatpush2.msra.mxu0 0.0
        %1283 = vmatprep.subr.mxu0 0.0
        %1284 = vmatpush2.msra.mxu0 0.0
        %1285 = vmatprep.subr.mxu0 0.0
        %1286 = vmatpush2.msra.mxu0 0.0
        %1287 = vmatprep.subr.mxu0 0.0
        %1288 = vmatpush2.msra.mxu0 0.0
        %1289 = vmatprep.subr.mxu0 0.0
        %1290 = vmatpush2.msra.mxu0 0.0
        %1291 = vmatprep.subr.mxu0 0.0
        %1292 = vmatpush2.msra.mxu0 0.0
        %1293 = vmatprep.mubr.f32.mxu0 0.0
        %1294 = vmatmul.mubr.f32.gmra.mxu0 %v1218
        %v1295 = vpop.f32.mrf.mxu0
        %v1296 = vadd.f32 %v1199, %v1295
        %v1297 = vpop.f32.mrf.mxu0
        %v1298 = vadd.f32 %v1199, %v1297
        %1299 = vmatprep.mubr.f32.mxu0 0.0
        %1300 = vmatmul.mubr.f32.gmra.mxu0 %v1221
        %v1301 = vpop.f32.mrf.mxu0
        %v1302 = vadd.f32 %v1204, %v1301
        %v1303 = vpop.f32.mrf.mxu0
        %v1304 = vadd.f32 %v1204, %v1303
        %1305 = vmatprep.mubr.f32.mxu0 0.0
        %1306 = vmatmul.mubr.f32.gmra.mxu0 %v1224
        %v1307 = vpop.f32.mrf.mxu0
        %v1308 = vadd.f32 %v1209, %v1307
        %v1309 = vpop.f32.mrf.mxu0
        %v1310 = vadd.f32 %v1209, %v1309
        %1311 = vmatprep.mubr.f32.mxu0 0.0
        %1312 = vmatmul.mubr.f32.gmra.mxu0 %v1227
        %v1313 = vpop.f32.mrf.mxu0
        %v1314 = vadd.f32 %v1214, %v1313
        %v1315 = vpop.f32.mrf.mxu0
        %v1316 = vadd.f32 %v1214, %v1315
        %1317 = vdwg.mxu0
        %v1318 = vmax.f32 %v1296, 0.0
        %v1319 = vmax.f32 %v1298, 0.0
        %v1320 = vmax.f32 %v1302, 0.0
        %v1321 = vmax.f32 %v1304, 0.0
        %v1322 = vmax.f32 %v1308, 0.0
        %v1323 = vmax.f32 %v1310, 0.0
        %v1324 = vmax.f32 %v1314, 0.0
        %v1325 = vmax.f32 %v1316, 0.0
        %v1326 = vld [vmem:[%s7] sm:$0x7]
        %v1327 = vld [vmem:[%s8] sm:$0x7]
        %1329 = vset.pattern.permute.xlu0 0
        %1330 = vperm.xlu0 %1329, %v1327
        %v1331 = vpop.permute.xlu0 %1330
        %vm1333 = vcmask 261120
        %v1335 = vsel %vm1333, %v1326, 0
        %1337 = vmatprep.subr.mxu0 0.0
        %1338 = vmatpush1.msra.mxu0 0.0
        %1339 = vmatprep.subr.mxu0 0.0
        %1340 = vmatpush1.msra.mxu0 0.0
        %1341 = vmatprep.subr.mxu0 0.0
        %1342 = vmatpush1.msra.mxu0 0.0
        %1343 = vmatprep.subr.mxu0 0.0
        %1344 = vmatpush1.msra.mxu0 0.0
        %1345 = vmatprep.subr.mxu0 0.0
        %1346 = vmatpush1.msra.mxu0 0.0
        %1347 = vmatprep.subr.mxu0 0.0
        %1348 = vmatpush1.msra.mxu0 0.0
        %1349 = vmatprep.subr.mxu0 0.0
        %1350 = vmatpush1.msra.mxu0 0.0
        %1351 = vmatprep.subr.mxu0 0.0
        %1352 = vmatpush1.msra.mxu0 0.0
        %1353 = vmatprep.subr.mxu0 0.0
        %1354 = vmatpush1.msra.mxu0 0.0
        %1355 = vmatprep.subr.mxu0 0.0
        %1356 = vmatpush1.msra.mxu0 0.0
        %1357 = vmatprep.subr.mxu0 0.0
        %1358 = vmatpush1.msra.mxu0 0.0
        %1359 = vmatprep.subr.mxu0 0.0
        %1360 = vmatpush1.msra.mxu0 0.0
        %1361 = vmatprep.subr.mxu0 %v1325
        %1362 = vmatpush1.msra.mxu0 %v1324
        %1363 = vmatprep.subr.mxu0 %v1323
        %1364 = vmatpush1.msra.mxu0 %v1322
        %1365 = vmatprep.subr.mxu0 %v1321
        %1366 = vmatpush1.msra.mxu0 %v1320
        %1367 = vmatprep.subr.mxu0 %v1319
        %1368 = vmatpush1.msra.mxu0 %v1318
        %1369 = vmatprep.subr.mxu0 0.0
        %1370 = vmatpush2.msra.mxu0 0.0
        %1371 = vmatprep.subr.mxu0 0.0
        %1372 = vmatpush2.msra.mxu0 0.0
        %1373 = vmatprep.subr.mxu0 0.0
        %1374 = vmatpush2.msra.mxu0 0.0
        %1375 = vmatprep.subr.mxu0 0.0
        %1376 = vmatpush2.msra.mxu0 0.0
        %1377 = vmatprep.subr.mxu0 0.0
        %1378 = vmatpush2.msra.mxu0 0.0
        %1379 = vmatprep.subr.mxu0 0.0
        %1380 = vmatpush2.msra.mxu0 0.0
        %1381 = vmatprep.subr.mxu0 0.0
        %1382 = vmatpush2.msra.mxu0 0.0
        %1383 = vmatprep.subr.mxu0 0.0
        %1384 = vmatpush2.msra.mxu0 0.0
        %1385 = vmatprep.subr.mxu0 0.0
        %1386 = vmatpush2.msra.mxu0 0.0
        %1387 = vmatprep.subr.mxu0 0.0
        %1388 = vmatpush2.msra.mxu0 0.0
        %1389 = vmatprep.subr.mxu0 0.0
        %1390 = vmatpush2.msra.mxu0 0.0
        %1391 = vmatprep.subr.mxu0 0.0
        %1392 = vmatpush2.msra.mxu0 0.0
        %1393 = vmatprep.subr.mxu0 0.0
        %1394 = vmatpush2.msra.mxu0 0.0
        %1395 = vmatprep.subr.mxu0 0.0
        %1396 = vmatpush2.msra.mxu0 0.0
        %1397 = vmatprep.subr.mxu0 0.0
        %1398 = vmatpush2.msra.mxu0 0.0
        %1399 = vmatprep.subr.mxu0 0.0
        %1400 = vmatpush2.msra.mxu0 0.0
        %1401 = vmatprep.mubr.f32.mxu0 0.0
        %1402 = vmatmul.mubr.f32.gmra.mxu0 %v1335
        %v1403 = vpop.f32.mrf.mxu0
        %v1404 = vadd.f32 %v1331, %v1403
        %v1405 = vpop.f32.mrf.mxu0
        %v1406 = vadd.f32 %v1331, %v1405
        %1407 = vdwg.mxu0
        %v1408 = vmax.f32 %v1404, 0.0
        %v1409 = vmax.f32 %v1406, 0.0
        %v1410 = vld [vmem:[#allocation6] sm:$0xff]
        %v1411 = vld [vmem:[#allocation6 + $0x8] sm:$0xff]
        %v1412 = vld [vmem:[#allocation6 + $0x10] sm:$0xff]
        %v1413 = vld [vmem:[#allocation6 + $0x18] sm:$0xff]
        %v1414 = vld [vmem:[#allocation6 + $0x20] sm:$0xff]
        %v1415 = vld [vmem:[#allocation6 + $0x28] sm:$0xff]
        %v1416 = vld [vmem:[#allocation6 + $0x30] sm:$0xff]
        %v1417 = vld [vmem:[#allocation6 + $0x38] sm:$0xff]
        %v1418 = vld [vmem:[#allocation6 + $0x40] sm:$0xff]
        %v1419 = vld [vmem:[#allocation6 + $0x48] sm:$0xff]
        %v1420 = vld [vmem:[#allocation6 + $0x50] sm:$0xff]
        %v1421 = vld [vmem:[#allocation6 + $0x58] sm:$0xff]
        %v1422 = vld [vmem:[#allocation6 + $0x60] sm:$0xff]
        %v1423 = vld [vmem:[#allocation6 + $0x68] sm:$0xff]
        %v1424 = vld [vmem:[#allocation6 + $0x70] sm:$0xff]
        %v1425 = vld [vmem:[#allocation6 + $0x78] sm:$0xff]
        %v1426 = vld [vmem:[#allocation6 + $0x80] sm:$0xff]
        %v1427 = vld [vmem:[#allocation6 + $0x88] sm:$0xff]
        %v1428 = vld [vmem:[#allocation6 + $0x90] sm:$0xff]
        %v1429 = vld [vmem:[#allocation6 + $0x98] sm:$0xff]
        %v1430 = vld [vmem:[#allocation6 + $0xa0] sm:$0xff]
        %v1431 = vld [vmem:[#allocation6 + $0xa8] sm:$0xff]
        %v1432 = vld [vmem:[#allocation6 + $0xb0] sm:$0xff]
        %v1433 = vld [vmem:[#allocation6 + $0xb8] sm:$0xff]
        %v1434 = vld [vmem:[#allocation6 + $0xc0] sm:$0xff]
        %v1435 = vld [vmem:[#allocation6 + $0xc8] sm:$0xff]
        %v1436 = vld [vmem:[#allocation6 + $0xd0] sm:$0xff]
        %v1437 = vld [vmem:[#allocation6 + $0xd8] sm:$0xff]
        %v1438 = vld [vmem:[#allocation6 + $0xe0] sm:$0xff]
        %v1439 = vld [vmem:[#allocation6 + $0xe8] sm:$0xff]
        %v1440 = vld [vmem:[#allocation6 + $0xf0] sm:$0xff]
        %v1441 = vld [vmem:[#allocation6 + $0xf8] sm:$0xff]
        %v1442 = vld [vmem:[#allocation6 + $0x100] sm:$0xff]
        %v1443 = vld [vmem:[#allocation6 + $0x108] sm:$0xff]
        %v1444 = vld [vmem:[#allocation6 + $0x110] sm:$0xff]
        %v1445 = vld [vmem:[#allocation6 + $0x118] sm:$0xff]
        %v1446 = vld [vmem:[#allocation6 + $0x120] sm:$0xff]
        %v1447 = vld [vmem:[#allocation6 + $0x128] sm:$0xff]
        %v1448 = vld [vmem:[#allocation6 + $0x130] sm:$0xff]
        %v1449 = vld [vmem:[#allocation6 + $0x138] sm:$0xff]
        %v1450 = vld [vmem:[#allocation6 + $0x140] sm:$0xff]
        %v1451 = vld [vmem:[#allocation6 + $0x148] sm:$0xff]
        %v1452 = vld [vmem:[#allocation6 + $0x150] sm:$0xff]
        %v1453 = vld [vmem:[#allocation6 + $0x158] sm:$0xff]
        %v1454 = vld [vmem:[#allocation6 + $0x160] sm:$0xff]
        %v1455 = vld [vmem:[#allocation6 + $0x168] sm:$0xff]
        %v1456 = vld [vmem:[#allocation6 + $0x170] sm:$0xff]
        %v1457 = vld [vmem:[#allocation6 + $0x178] sm:$0xff]
        %v1458 = vld [vmem:[#allocation6 + $0x180] sm:$0xff]
        %v1459 = vld [vmem:[#allocation6 + $0x188] sm:$0xff]
        %v1460 = vld [vmem:[#allocation6 + $0x190] sm:$0xff]
        %v1461 = vld [vmem:[#allocation6 + $0x198] sm:$0xff]
        %v1462 = vld [vmem:[#allocation6 + $0x1a0] sm:$0xff]
        %v1463 = vld [vmem:[#allocation6 + $0x1a8] sm:$0xff]
        %v1464 = vld [vmem:[#allocation6 + $0x1b0] sm:$0xff]
        %v1465 = vld [vmem:[#allocation6 + $0x1b8] sm:$0xff]
        %v1466 = vld [vmem:[#allocation6 + $0x1c0] sm:$0xff]
        %v1467 = vld [vmem:[#allocation6 + $0x1c8] sm:$0xff]
        %v1468 = vld [vmem:[#allocation6 + $0x1d0] sm:$0xff]
        %v1469 = vld [vmem:[#allocation6 + $0x1d8] sm:$0xff]
        %v1470 = vld [vmem:[#allocation6 + $0x1e0] sm:$0xff]
        %v1471 = vld [vmem:[#allocation6 + $0x1e8] sm:$0xff]
        %v1472 = vld [vmem:[#allocation6 + $0x1f0] sm:$0xff]
        %v1473 = vld [vmem:[#allocation6 + $0x1f8] sm:$0xff]
        %v1474 = vld [vmem:[#allocation6 + $0x200] sm:$0xff]
        %v1475 = vld [vmem:[#allocation6 + $0x208] sm:$0xff]
        %v1476 = vld [vmem:[#allocation6 + $0x210] sm:$0xff]
        %v1477 = vld [vmem:[#allocation6 + $0x218] sm:$0xff]
        %v1478 = vld [vmem:[#allocation6 + $0x220] sm:$0xff]
        %v1479 = vld [vmem:[#allocation6 + $0x228] sm:$0xff]
        %v1480 = vld [vmem:[#allocation6 + $0x230] sm:$0xff]
        %v1481 = vld [vmem:[#allocation6 + $0x238] sm:$0xff]
        %v1482 = vld [vmem:[#allocation6 + $0x240] sm:$0xff]
        %v1483 = vld [vmem:[#allocation6 + $0x248] sm:$0xff]
        %v1484 = vld [vmem:[#allocation6 + $0x250] sm:$0xff]
        %v1485 = vld [vmem:[#allocation6 + $0x258] sm:$0xff]
        %v1486 = vld [vmem:[#allocation6 + $0x260] sm:$0xff]
        %v1487 = vld [vmem:[#allocation6 + $0x268] sm:$0xff]
        %v1488 = vld [vmem:[#allocation6 + $0x270] sm:$0xff]
        %v1489 = vld [vmem:[#allocation6 + $0x278] sm:$0xff]
        %v1490 = vld [vmem:[#allocation6 + $0x280] sm:$0xff]
        %v1491 = vld [vmem:[#allocation6 + $0x288] sm:$0xff]
        %v1492 = vld [vmem:[#allocation6 + $0x290] sm:$0xff]
        %v1493 = vld [vmem:[#allocation6 + $0x298] sm:$0xff]
        %v1494 = vld [vmem:[#allocation6 + $0x2a0] sm:$0xff]
        %v1495 = vld [vmem:[#allocation6 + $0x2a8] sm:$0xff]
        %v1496 = vld [vmem:[#allocation6 + $0x2b0] sm:$0xff]
        %v1497 = vld [vmem:[#allocation6 + $0x2b8] sm:$0xff]
        %v1498 = vld [vmem:[#allocation6 + $0x2c0] sm:$0xff]
        %v1499 = vld [vmem:[#allocation6 + $0x2c8] sm:$0xff]
        %v1500 = vld [vmem:[#allocation6 + $0x2d0] sm:$0xff]
        %v1501 = vld [vmem:[#allocation6 + $0x2d8] sm:$0xff]
        %v1502 = vld [vmem:[#allocation6 + $0x2e0] sm:$0xff]
        %v1503 = vld [vmem:[#allocation6 + $0x2e8] sm:$0xff]
        %v1504 = vld [vmem:[#allocation6 + $0x2f0] sm:$0xff]
        %v1505 = vld [vmem:[#allocation6 + $0x2f8] sm:$0xff]
        %v1506 = vld [vmem:[#allocation6 + $0x300] sm:$0xff]
        %v1507 = vld [vmem:[#allocation6 + $0x308] sm:$0xff]
        %v1508 = vld [vmem:[#allocation6 + $0x310] sm:$0xff]
        %v1509 = vld [vmem:[#allocation6 + $0x318] sm:$0xff]
        %v1510 = vld [vmem:[#allocation6 + $0x320] sm:$0xff]
        %v1511 = vld [vmem:[#allocation6 + $0x328] sm:$0xff]
        %v1512 = vld [vmem:[#allocation6 + $0x330] sm:$0xff]
        %v1513 = vld [vmem:[#allocation6 + $0x338] sm:$0xff]
        %v1514 = vld [vmem:[#allocation6 + $0x340] sm:$0xff]
        %v1515 = vld [vmem:[#allocation6 + $0x348] sm:$0xff]
        %v1516 = vld [vmem:[#allocation6 + $0x350] sm:$0xff]
        %v1517 = vld [vmem:[#allocation6 + $0x358] sm:$0xff]
        %v1518 = vld [vmem:[#allocation6 + $0x360] sm:$0xff]
        %v1519 = vld [vmem:[#allocation6 + $0x368] sm:$0xff]
        %v1520 = vld [vmem:[#allocation6 + $0x370] sm:$0xff]
        %v1521 = vld [vmem:[#allocation6 + $0x378] sm:$0xff]
        %v1522 = vld [vmem:[#allocation6 + $0x380] sm:$0xff]
        %v1523 = vld [vmem:[#allocation6 + $0x388] sm:$0xff]
        %v1524 = vld [vmem:[#allocation6 + $0x390] sm:$0xff]
        %v1525 = vld [vmem:[#allocation6 + $0x398] sm:$0xff]
        %v1526 = vld [vmem:[#allocation6 + $0x3a0] sm:$0xff]
        %v1527 = vld [vmem:[#allocation6 + $0x3a8] sm:$0xff]
        %v1528 = vld [vmem:[#allocation6 + $0x3b0] sm:$0xff]
        %v1529 = vld [vmem:[#allocation6 + $0x3b8] sm:$0xff]
        %v1530 = vld [vmem:[#allocation6 + $0x3c0] sm:$0xff]
        %v1531 = vld [vmem:[#allocation6 + $0x3c8] sm:$0xff]
        %v1532 = vld [vmem:[#allocation6 + $0x3d0] sm:$0xff]
        %v1533 = vld [vmem:[#allocation6 + $0x3d8] sm:$0xff]
        %v1534 = vld [vmem:[#allocation6 + $0x3e0] sm:$0xff]
        %v1535 = vld [vmem:[#allocation6 + $0x3e8] sm:$0xff]
        %v1536 = vld [vmem:[#allocation6 + $0x3f0] sm:$0xff]
        %v1537 = vld [vmem:[#allocation6 + $0x3f8] sm:$0xff]
        %v1538 = vld [vmem:[#allocation6 + $0x400] sm:$0xff]
        %v1539 = vld [vmem:[#allocation6 + $0x408] sm:$0xff]
        %v1540 = vld [vmem:[#allocation6 + $0x410] sm:$0xff]
        %v1541 = vld [vmem:[#allocation6 + $0x418] sm:$0xff]
        %v1542 = vld [vmem:[#allocation6 + $0x420] sm:$0xff]
        %v1543 = vld [vmem:[#allocation6 + $0x428] sm:$0xff]
        %v1544 = vld [vmem:[#allocation6 + $0x430] sm:$0xff]
        %v1545 = vld [vmem:[#allocation6 + $0x438] sm:$0xff]
        %v1546 = vld [vmem:[#allocation6 + $0x440] sm:$0xff]
        %v1547 = vld [vmem:[#allocation6 + $0x448] sm:$0xff]
        %v1548 = vld [vmem:[#allocation6 + $0x450] sm:$0xff]
        %v1549 = vld [vmem:[#allocation6 + $0x458] sm:$0xff]
        %v1550 = vld [vmem:[#allocation6 + $0x460] sm:$0xff]
        %v1551 = vld [vmem:[#allocation6 + $0x468] sm:$0xff]
        %v1552 = vld [vmem:[#allocation6 + $0x470] sm:$0xff]
        %v1553 = vld [vmem:[#allocation6 + $0x478] sm:$0xff]
        %v1554 = vld [vmem:[#allocation6 + $0x480] sm:$0xff]
        %v1555 = vld [vmem:[#allocation6 + $0x488] sm:$0xff]
        %v1556 = vld [vmem:[#allocation6 + $0x490] sm:$0xff]
        %v1557 = vld [vmem:[#allocation6 + $0x498] sm:$0xff]
        %v1558 = vld [vmem:[#allocation6 + $0x4a0] sm:$0xff]
        %v1559 = vld [vmem:[#allocation6 + $0x4a8] sm:$0xff]
        %v1560 = vld [vmem:[#allocation6 + $0x4b0] sm:$0xff]
        %v1561 = vld [vmem:[#allocation6 + $0x4b8] sm:$0xff]
        %v1562 = vld [vmem:[#allocation6 + $0x4c0] sm:$0xff]
        %v1563 = vld [vmem:[#allocation6 + $0x4c8] sm:$0xff]
        %v1564 = vld [vmem:[#allocation6 + $0x4d0] sm:$0xff]
        %v1565 = vld [vmem:[#allocation6 + $0x4d8] sm:$0xff]
        %v1566 = vld [vmem:[#allocation6 + $0x4e0] sm:$0xff]
        %v1567 = vld [vmem:[#allocation6 + $0x4e8] sm:$0xff]
        %v1568 = vld [vmem:[#allocation6 + $0x4f0] sm:$0xff]
        %v1569 = vld [vmem:[#allocation6 + $0x4f8] sm:$0xff]
        %v1570 = vld [vmem:[#allocation6 + $0x500] sm:$0xff]
        %v1571 = vld [vmem:[#allocation6 + $0x508] sm:$0xff]
        %v1572 = vld [vmem:[#allocation6 + $0x510] sm:$0xff]
        %v1573 = vld [vmem:[#allocation6 + $0x518] sm:$0xff]
        %v1574 = vld [vmem:[#allocation6 + $0x520] sm:$0xff]
        %v1575 = vld [vmem:[#allocation6 + $0x528] sm:$0xff]
        %v1576 = vld [vmem:[#allocation6 + $0x530] sm:$0xff]
        %v1577 = vld [vmem:[#allocation6 + $0x538] sm:$0xff]
        %v1578 = vld [vmem:[#allocation6 + $0x540] sm:$0xff]
        %v1579 = vld [vmem:[#allocation6 + $0x548] sm:$0xff]
        %v1580 = vld [vmem:[#allocation6 + $0x550] sm:$0xff]
        %v1581 = vld [vmem:[#allocation6 + $0x558] sm:$0xff]
        %v1582 = vld [vmem:[#allocation6 + $0x560] sm:$0xff]
        %v1583 = vld [vmem:[#allocation6 + $0x568] sm:$0xff]
        %v1584 = vld [vmem:[#allocation6 + $0x570] sm:$0xff]
        %v1585 = vld [vmem:[#allocation6 + $0x578] sm:$0xff]
        %v1586 = vld [vmem:[#allocation6 + $0x580] sm:$0xff]
        %v1587 = vld [vmem:[#allocation6 + $0x588] sm:$0xff]
        %v1588 = vld [vmem:[#allocation6 + $0x590] sm:$0xff]
        %v1589 = vld [vmem:[#allocation6 + $0x598] sm:$0xff]
        %v1590 = vld [vmem:[#allocation6 + $0x5a0] sm:$0xff]
        %v1591 = vld [vmem:[#allocation6 + $0x5a8] sm:$0xff]
        %v1592 = vld [vmem:[#allocation6 + $0x5b0] sm:$0xff]
        %v1593 = vld [vmem:[#allocation6 + $0x5b8] sm:$0xff]
        %v1594 = vld [vmem:[#allocation6 + $0x5c0] sm:$0xff]
        %v1595 = vld [vmem:[#allocation6 + $0x5c8] sm:$0xff]
        %v1596 = vld [vmem:[#allocation6 + $0x5d0] sm:$0xff]
        %v1597 = vld [vmem:[#allocation6 + $0x5d8] sm:$0xff]
        %v1598 = vld [vmem:[#allocation6 + $0x5e0] sm:$0xff]
        %v1599 = vld [vmem:[#allocation6 + $0x5e8] sm:$0xff]
        %v1600 = vld [vmem:[#allocation6 + $0x5f0] sm:$0xff]
        %v1601 = vld [vmem:[#allocation6 + $0x5f8] sm:$0xff]
        %v1602 = vld [vmem:[#allocation6 + $0x600] sm:$0xff]
        %v1603 = vld [vmem:[#allocation6 + $0x608] sm:$0xff]
        %v1604 = vld [vmem:[#allocation6 + $0x610] sm:$0xff]
        %v1605 = vld [vmem:[#allocation6 + $0x618] sm:$0xff]
        %v1606 = vld [vmem:[#allocation6 + $0x620] sm:$0xff]
        %v1607 = vld [vmem:[#allocation6 + $0x628] sm:$0xff]
        %v1608 = vld [vmem:[#allocation6 + $0x630] sm:$0xff]
        %v1609 = vld [vmem:[#allocation6 + $0x638] sm:$0xff]
        %v1610 = vld [vmem:[#allocation6 + $0x640] sm:$0xff]
        %v1611 = vld [vmem:[#allocation6 + $0x648] sm:$0xff]
        %v1612 = vld [vmem:[#allocation6 + $0x650] sm:$0xff]
        %v1613 = vld [vmem:[#allocation6 + $0x658] sm:$0xff]
        %v1614 = vld [vmem:[#allocation6 + $0x660] sm:$0xff]
        %v1615 = vld [vmem:[#allocation6 + $0x668] sm:$0xff]
        %v1616 = vld [vmem:[#allocation6 + $0x670] sm:$0xff]
        %v1617 = vld [vmem:[#allocation6 + $0x678] sm:$0xff]
        %v1618 = vld [vmem:[#allocation6 + $0x680] sm:$0xff]
        %v1619 = vld [vmem:[#allocation6 + $0x688] sm:$0xff]
        %v1620 = vld [vmem:[#allocation6 + $0x690] sm:$0xff]
        %v1621 = vld [vmem:[#allocation6 + $0x698] sm:$0xff]
        %v1622 = vld [vmem:[#allocation6 + $0x6a0] sm:$0xff]
        %v1623 = vld [vmem:[#allocation6 + $0x6a8] sm:$0xff]
        %v1624 = vld [vmem:[#allocation6 + $0x6b0] sm:$0xff]
        %v1625 = vld [vmem:[#allocation6 + $0x6b8] sm:$0xff]
        %v1626 = vld [vmem:[#allocation6 + $0x6c0] sm:$0xff]
        %v1627 = vld [vmem:[#allocation6 + $0x6c8] sm:$0xff]
        %v1628 = vld [vmem:[#allocation6 + $0x6d0] sm:$0xff]
        %v1629 = vld [vmem:[#allocation6 + $0x6d8] sm:$0xff]
        %v1630 = vld [vmem:[#allocation6 + $0x6e0] sm:$0xff]
        %v1631 = vld [vmem:[#allocation6 + $0x6e8] sm:$0xff]
        %v1632 = vld [vmem:[#allocation6 + $0x6f0] sm:$0xff]
        %v1633 = vld [vmem:[#allocation6 + $0x6f8] sm:$0xff]
        %v1634 = vld [vmem:[#allocation6 + $0x700] sm:$0xff]
        %v1635 = vld [vmem:[#allocation6 + $0x708] sm:$0xff]
        %v1636 = vld [vmem:[#allocation6 + $0x710] sm:$0xff]
        %v1637 = vld [vmem:[#allocation6 + $0x718] sm:$0xff]
        %v1638 = vld [vmem:[#allocation6 + $0x720] sm:$0xff]
        %v1639 = vld [vmem:[#allocation6 + $0x728] sm:$0xff]
        %v1640 = vld [vmem:[#allocation6 + $0x730] sm:$0xff]
        %v1641 = vld [vmem:[#allocation6 + $0x738] sm:$0xff]
        %v1642 = vld [vmem:[#allocation6 + $0x740] sm:$0xff]
        %v1643 = vld [vmem:[#allocation6 + $0x748] sm:$0xff]
        %v1644 = vld [vmem:[#allocation6 + $0x750] sm:$0xff]
        %v1645 = vld [vmem:[#allocation6 + $0x758] sm:$0xff]
        %v1646 = vld [vmem:[#allocation6 + $0x760] sm:$0xff]
        %v1647 = vld [vmem:[#allocation6 + $0x768] sm:$0xff]
        %v1648 = vld [vmem:[#allocation6 + $0x770] sm:$0xff]
        %v1649 = vld [vmem:[#allocation6 + $0x778] sm:$0xff]
        %v1650 = vld [vmem:[#allocation6 + $0x780] sm:$0xff]
        %v1651 = vld [vmem:[#allocation6 + $0x788] sm:$0xff]
        %v1652 = vld [vmem:[#allocation6 + $0x790] sm:$0xff]
        %v1653 = vld [vmem:[#allocation6 + $0x798] sm:$0xff]
        %v1654 = vld [vmem:[#allocation6 + $0x7a0] sm:$0xff]
        %v1655 = vld [vmem:[#allocation6 + $0x7a8] sm:$0xff]
        %v1656 = vld [vmem:[#allocation6 + $0x7b0] sm:$0xff]
        %v1657 = vld [vmem:[#allocation6 + $0x7b8] sm:$0xff]
        %v1658 = vld [vmem:[#allocation6 + $0x7c0] sm:$0xff]
        %v1659 = vld [vmem:[#allocation6 + $0x7c8] sm:$0xff]
        %v1660 = vld [vmem:[#allocation6 + $0x7d0] sm:$0xff]
        %v1661 = vld [vmem:[#allocation6 + $0x7d8] sm:$0xff]
        %v1662 = vld [vmem:[#allocation6 + $0x7e0] sm:$0xff]
        %v1663 = vld [vmem:[#allocation6 + $0x7e8] sm:$0xff]
        %v1664 = vld [vmem:[#allocation6 + $0x7f0] sm:$0xff]
        %v1665 = vld [vmem:[#allocation6 + $0x7f8] sm:$0xff]
        %1666 = vmatprep.subr.mxu0 %v1531
        %1667 = vmatpush1.msra.mxu0 %v1530
        %1668 = vmatprep.subr.mxu0 %v1523
        %1669 = vmatpush1.msra.mxu0 %v1522
        %1670 = vmatprep.subr.mxu0 %v1515
        %1671 = vmatpush1.msra.mxu0 %v1514
        %1672 = vmatprep.subr.mxu0 %v1507
        %1673 = vmatpush1.msra.mxu0 %v1506
        %1674 = vmatprep.subr.mxu0 %v1499
        %1675 = vmatpush1.msra.mxu0 %v1498
        %1676 = vmatprep.subr.mxu0 %v1491
        %1677 = vmatpush1.msra.mxu0 %v1490
        %1678 = vmatprep.subr.mxu0 %v1483
        %1679 = vmatpush1.msra.mxu0 %v1482
        %1680 = vmatprep.subr.mxu0 %v1475
        %1681 = vmatpush1.msra.mxu0 %v1474
        %1682 = vmatprep.subr.mxu0 %v1467
        %1683 = vmatpush1.msra.mxu0 %v1466
        %1684 = vmatprep.subr.mxu0 %v1459
        %1685 = vmatpush1.msra.mxu0 %v1458
        %1686 = vmatprep.subr.mxu0 %v1451
        %1687 = vmatpush1.msra.mxu0 %v1450
        %1688 = vmatprep.subr.mxu0 %v1443
        %1689 = vmatpush1.msra.mxu0 %v1442
        %1690 = vmatprep.subr.mxu0 %v1435
        %1691 = vmatpush1.msra.mxu0 %v1434
        %1692 = vmatprep.subr.mxu0 %v1427
        %1693 = vmatpush1.msra.mxu0 %v1426
        %1694 = vmatprep.subr.mxu0 %v1419
        %1695 = vmatpush1.msra.mxu0 %v1418
        %1696 = vmatprep.subr.mxu0 %v1411
        %1697 = vmatpush1.msra.mxu0 %v1410
        %1698 = vmatprep.subr.mxu0 %v1659
        %1699 = vmatpush2.msra.mxu0 %v1658
        %1700 = vmatprep.subr.mxu0 %v1651
        %1701 = vmatpush2.msra.mxu0 %v1650
        %1702 = vmatprep.subr.mxu0 %v1643
        %1703 = vmatpush2.msra.mxu0 %v1642
        %1704 = vmatprep.subr.mxu0 %v1635
        %1705 = vmatpush2.msra.mxu0 %v1634
        %1706 = vmatprep.subr.mxu0 %v1627
        %1707 = vmatpush2.msra.mxu0 %v1626
        %1708 = vmatprep.subr.mxu0 %v1619
        %1709 = vmatpush2.msra.mxu0 %v1618
        %1710 = vmatprep.subr.mxu0 %v1611
        %1711 = vmatpush2.msra.mxu0 %v1610
        %1712 = vmatprep.subr.mxu0 %v1603
        %1713 = vmatpush2.msra.mxu0 %v1602
        %1714 = vmatprep.subr.mxu0 %v1595
        %1715 = vmatpush2.msra.mxu0 %v1594
        %1716 = vmatprep.subr.mxu0 %v1587
        %1717 = vmatpush2.msra.mxu0 %v1586
        %1718 = vmatprep.subr.mxu0 %v1579
        %1719 = vmatpush2.msra.mxu0 %v1578
        %1720 = vmatprep.subr.mxu0 %v1571
        %1721 = vmatpush2.msra.mxu0 %v1570
        %1722 = vmatprep.subr.mxu0 %v1563
        %1723 = vmatpush2.msra.mxu0 %v1562
        %1724 = vmatprep.subr.mxu0 %v1555
        %1725 = vmatpush2.msra.mxu0 %v1554
        %1726 = vmatprep.subr.mxu0 %v1547
        %1727 = vmatpush2.msra.mxu0 %v1546
        %1728 = vmatprep.subr.mxu0 %v1539
        %1729 = vmatpush2.msra.mxu0 %v1538
        %1730 = vmatprep.mubr.f32.mxu0 %v1409
        %1731 = vmatmul.mubr.f32.gmra.mxu0 %v1408
        %v1732 = vpop.f32.mrf.mxu0
        %v1733 = vadd.f32 0.0, %v1732
        %v1734 = vpop.f32.mrf.mxu0
        %v1735 = vadd.f32 0.0, %v1734
        %1736 = vdwg.mxu0
        %1737 = vmatprep.subr.mxu0 %v1533
        %1738 = vmatpush1.msra.mxu0 %v1532
        %1739 = vmatprep.subr.mxu0 %v1525
        %1740 = vmatpush1.msra.mxu0 %v1524
        %1741 = vmatprep.subr.mxu0 %v1517
        %1742 = vmatpush1.msra.mxu0 %v1516
        %1743 = vmatprep.subr.mxu0 %v1509
        %1744 = vmatpush1.msra.mxu0 %v1508
        %1745 = vmatprep.subr.mxu0 %v1501
        %1746 = vmatpush1.msra.mxu0 %v1500
        %1747 = vmatprep.subr.mxu0 %v1493
        %1748 = vmatpush1.msra.mxu0 %v1492
        %1749 = vmatprep.subr.mxu0 %v1485
        %1750 = vmatpush1.msra.mxu0 %v1484
        %1751 = vmatprep.subr.mxu0 %v1477
        %1752 = vmatpush1.msra.mxu0 %v1476
        %1753 = vmatprep.subr.mxu0 %v1469
        %1754 = vmatpush1.msra.mxu0 %v1468
        %1755 = vmatprep.subr.mxu0 %v1461
        %1756 = vmatpush1.msra.mxu0 %v1460
        %1757 = vmatprep.subr.mxu0 %v1453
        %1758 = vmatpush1.msra.mxu0 %v1452
        %1759 = vmatprep.subr.mxu0 %v1445
        %1760 = vmatpush1.msra.mxu0 %v1444
        %1761 = vmatprep.subr.mxu0 %v1437
        %1762 = vmatpush1.msra.mxu0 %v1436
        %1763 = vmatprep.subr.mxu0 %v1429
        %1764 = vmatpush1.msra.mxu0 %v1428
        %1765 = vmatprep.subr.mxu0 %v1421
        %1766 = vmatpush1.msra.mxu0 %v1420
        %1767 = vmatprep.subr.mxu0 %v1413
        %1768 = vmatpush1.msra.mxu0 %v1412
        %1769 = vmatprep.subr.mxu0 %v1661
        %1770 = vmatpush2.msra.mxu0 %v1660
        %1771 = vmatprep.subr.mxu0 %v1653
        %1772 = vmatpush2.msra.mxu0 %v1652
        %1773 = vmatprep.subr.mxu0 %v1645
        %1774 = vmatpush2.msra.mxu0 %v1644
        %1775 = vmatprep.subr.mxu0 %v1637
        %1776 = vmatpush2.msra.mxu0 %v1636
        %1777 = vmatprep.subr.mxu0 %v1629
        %1778 = vmatpush2.msra.mxu0 %v1628
        %1779 = vmatprep.subr.mxu0 %v1621
        %1780 = vmatpush2.msra.mxu0 %v1620
        %1781 = vmatprep.subr.mxu0 %v1613
        %1782 = vmatpush2.msra.mxu0 %v1612
        %1783 = vmatprep.subr.mxu0 %v1605
        %1784 = vmatpush2.msra.mxu0 %v1604
        %1785 = vmatprep.subr.mxu0 %v1597
        %1786 = vmatpush2.msra.mxu0 %v1596
        %1787 = vmatprep.subr.mxu0 %v1589
        %1788 = vmatpush2.msra.mxu0 %v1588
        %1789 = vmatprep.subr.mxu0 %v1581
        %1790 = vmatpush2.msra.mxu0 %v1580
        %1791 = vmatprep.subr.mxu0 %v1573
        %1792 = vmatpush2.msra.mxu0 %v1572
        %1793 = vmatprep.subr.mxu0 %v1565
        %1794 = vmatpush2.msra.mxu0 %v1564
        %1795 = vmatprep.subr.mxu0 %v1557
        %1796 = vmatpush2.msra.mxu0 %v1556
        %1797 = vmatprep.subr.mxu0 %v1549
        %1798 = vmatpush2.msra.mxu0 %v1548
        %1799 = vmatprep.subr.mxu0 %v1541
        %1800 = vmatpush2.msra.mxu0 %v1540
        %1801 = vmatprep.mubr.f32.mxu0 %v1409
        %1802 = vmatmul.mubr.f32.gmra.mxu0 %v1408
        %v1803 = vpop.f32.mrf.mxu0
        %v1804 = vadd.f32 0.0, %v1803
        %v1805 = vpop.f32.mrf.mxu0
        %v1806 = vadd.f32 0.0, %v1805
        %1807 = vdwg.mxu0
        %1808 = vmatprep.subr.mxu0 %v1535
        %1809 = vmatpush1.msra.mxu0 %v1534
        %1810 = vmatprep.subr.mxu0 %v1527
        %1811 = vmatpush1.msra.mxu0 %v1526
        %1812 = vmatprep.subr.mxu0 %v1519
        %1813 = vmatpush1.msra.mxu0 %v1518
        %1814 = vmatprep.subr.mxu0 %v1511
        %1815 = vmatpush1.msra.mxu0 %v1510
        %1816 = vmatprep.subr.mxu0 %v1503
        %1817 = vmatpush1.msra.mxu0 %v1502
        %1818 = vmatprep.subr.mxu0 %v1495
        %1819 = vmatpush1.msra.mxu0 %v1494
        %1820 = vmatprep.subr.mxu0 %v1487
        %1821 = vmatpush1.msra.mxu0 %v1486
        %1822 = vmatprep.subr.mxu0 %v1479
        %1823 = vmatpush1.msra.mxu0 %v1478
        %1824 = vmatprep.subr.mxu0 %v1471
        %1825 = vmatpush1.msra.mxu0 %v1470
        %1826 = vmatprep.subr.mxu0 %v1463
        %1827 = vmatpush1.msra.mxu0 %v1462
        %1828 = vmatprep.subr.mxu0 %v1455
        %1829 = vmatpush1.msra.mxu0 %v1454
        %1830 = vmatprep.subr.mxu0 %v1447
        %1831 = vmatpush1.msra.mxu0 %v1446
        %1832 = vmatprep.subr.mxu0 %v1439
        %1833 = vmatpush1.msra.mxu0 %v1438
        %1834 = vmatprep.subr.mxu0 %v1431
        %1835 = vmatpush1.msra.mxu0 %v1430
        %1836 = vmatprep.subr.mxu0 %v1423
        %1837 = vmatpush1.msra.mxu0 %v1422
        %1838 = vmatprep.subr.mxu0 %v1415
        %1839 = vmatpush1.msra.mxu0 %v1414
        %1840 = vmatprep.subr.mxu0 %v1663
        %1841 = vmatpush2.msra.mxu0 %v1662
        %1842 = vmatprep.subr.mxu0 %v1655
        %1843 = vmatpush2.msra.mxu0 %v1654
        %1844 = vmatprep.subr.mxu0 %v1647
        %1845 = vmatpush2.msra.mxu0 %v1646
        %1846 = vmatprep.subr.mxu0 %v1639
        %1847 = vmatpush2.msra.mxu0 %v1638
        %1848 = vmatprep.subr.mxu0 %v1631
        %1849 = vmatpush2.msra.mxu0 %v1630
        %1850 = vmatprep.subr.mxu0 %v1623
        %1851 = vmatpush2.msra.mxu0 %v1622
        %1852 = vmatprep.subr.mxu0 %v1615
        %1853 = vmatpush2.msra.mxu0 %v1614
        %1854 = vmatprep.subr.mxu0 %v1607
        %1855 = vmatpush2.msra.mxu0 %v1606
        %1856 = vmatprep.subr.mxu0 %v1599
        %1857 = vmatpush2.msra.mxu0 %v1598
        %1858 = vmatprep.subr.mxu0 %v1591
        %1859 = vmatpush2.msra.mxu0 %v1590
        %1860 = vmatprep.subr.mxu0 %v1583
        %1861 = vmatpush2.msra.mxu0 %v1582
        %1862 = vmatprep.subr.mxu0 %v1575
        %1863 = vmatpush2.msra.mxu0 %v1574
        %1864 = vmatprep.subr.mxu0 %v1567
        %1865 = vmatpush2.msra.mxu0 %v1566
        %1866 = vmatprep.subr.mxu0 %v1559
        %1867 = vmatpush2.msra.mxu0 %v1558
        %1868 = vmatprep.subr.mxu0 %v1551
        %1869 = vmatpush2.msra.mxu0 %v1550
        %1870 = vmatprep.subr.mxu0 %v1543
        %1871 = vmatpush2.msra.mxu0 %v1542
        %1872 = vmatprep.mubr.f32.mxu0 %v1409
        %1873 = vmatmul.mubr.f32.gmra.mxu0 %v1408
        %v1874 = vpop.f32.mrf.mxu0
        %v1875 = vadd.f32 0.0, %v1874
        %v1876 = vpop.f32.mrf.mxu0
        %v1877 = vadd.f32 0.0, %v1876
        %1878 = vdwg.mxu0
        %1879 = vmatprep.subr.mxu0 %v1537
        %1880 = vmatpush1.msra.mxu0 %v1536
        %1881 = vmatprep.subr.mxu0 %v1529
        %1882 = vmatpush1.msra.mxu0 %v1528
        %1883 = vmatprep.subr.mxu0 %v1521
        %1884 = vmatpush1.msra.mxu0 %v1520
        %1885 = vmatprep.subr.mxu0 %v1513
        %1886 = vmatpush1.msra.mxu0 %v1512
        %1887 = vmatprep.subr.mxu0 %v1505
        %1888 = vmatpush1.msra.mxu0 %v1504
        %1889 = vmatprep.subr.mxu0 %v1497
        %1890 = vmatpush1.msra.mxu0 %v1496
        %1891 = vmatprep.subr.mxu0 %v1489
        %1892 = vmatpush1.msra.mxu0 %v1488
        %1893 = vmatprep.subr.mxu0 %v1481
        %1894 = vmatpush1.msra.mxu0 %v1480
        %1895 = vmatprep.subr.mxu0 %v1473
        %1896 = vmatpush1.msra.mxu0 %v1472
        %1897 = vmatprep.subr.mxu0 %v1465
        %1898 = vmatpush1.msra.mxu0 %v1464
        %1899 = vmatprep.subr.mxu0 %v1457
        %1900 = vmatpush1.msra.mxu0 %v1456
        %1901 = vmatprep.subr.mxu0 %v1449
        %1902 = vmatpush1.msra.mxu0 %v1448
        %1903 = vmatprep.subr.mxu0 %v1441
        %1904 = vmatpush1.msra.mxu0 %v1440
        %1905 = vmatprep.subr.mxu0 %v1433
        %1906 = vmatpush1.msra.mxu0 %v1432
        %1907 = vmatprep.subr.mxu0 %v1425
        %1908 = vmatpush1.msra.mxu0 %v1424
        %1909 = vmatprep.subr.mxu0 %v1417
        %1910 = vmatpush1.msra.mxu0 %v1416
        %1911 = vmatprep.subr.mxu0 %v1665
        %1912 = vmatpush2.msra.mxu0 %v1664
        %1913 = vmatprep.subr.mxu0 %v1657
        %1914 = vmatpush2.msra.mxu0 %v1656
        %1915 = vmatprep.subr.mxu0 %v1649
        %1916 = vmatpush2.msra.mxu0 %v1648
        %1917 = vmatprep.subr.mxu0 %v1641
        %1918 = vmatpush2.msra.mxu0 %v1640
        %1919 = vmatprep.subr.mxu0 %v1633
        %1920 = vmatpush2.msra.mxu0 %v1632
        %1921 = vmatprep.subr.mxu0 %v1625
        %1922 = vmatpush2.msra.mxu0 %v1624
        %1923 = vmatprep.subr.mxu0 %v1617
        %1924 = vmatpush2.msra.mxu0 %v1616
        %1925 = vmatprep.subr.mxu0 %v1609
        %1926 = vmatpush2.msra.mxu0 %v1608
        %1927 = vmatprep.subr.mxu0 %v1601
        %1928 = vmatpush2.msra.mxu0 %v1600
        %1929 = vmatprep.subr.mxu0 %v1593
        %1930 = vmatpush2.msra.mxu0 %v1592
        %1931 = vmatprep.subr.mxu0 %v1585
        %1932 = vmatpush2.msra.mxu0 %v1584
        %1933 = vmatprep.subr.mxu0 %v1577
        %1934 = vmatpush2.msra.mxu0 %v1576
        %1935 = vmatprep.subr.mxu0 %v1569
        %1936 = vmatpush2.msra.mxu0 %v1568
        %1937 = vmatprep.subr.mxu0 %v1561
        %1938 = vmatpush2.msra.mxu0 %v1560
        %1939 = vmatprep.subr.mxu0 %v1553
        %1940 = vmatpush2.msra.mxu0 %v1552
        %1941 = vmatprep.subr.mxu0 %v1545
        %1942 = vmatpush2.msra.mxu0 %v1544
        %1943 = vmatprep.mubr.f32.mxu0 %v1409
        %1944 = vmatmul.mubr.f32.gmra.mxu0 %v1408
        %v1945 = vpop.f32.mrf.mxu0
        %v1946 = vadd.f32 0.0, %v1945
        %v1947 = vpop.f32.mrf.mxu0
        %v1948 = vadd.f32 0.0, %v1947
        %1949 = vdwg.mxu0
        %v1958 = vcombine.low %v1733, %v1735
        %v1959 = vcombine.low %v1804, %v1806
        %v1960 = vcombine.low %v1875, %v1877
        %v1961 = vcombine.low %v1946, %v1948
        %1966 = vst [vmem:[%s408] sm:$0x77] %v1958
        %1967 = vst [vmem:[%s408 + $0x8] sm:$0x77] %v1959
        %1968 = vst [vmem:[%s408 + $0x10] sm:$0x77] %v1960
        %1969 = vst [vmem:[%s408 + $0x18] sm:$0x77] %v1961
        %p1970 = scmp.lt.s32.totalorder %s25, 1
        %s1971 = scalar_select %p1970, %s25, 1
        %s1972 = smul.addr %s1971, 8
        %s1973 = smul.addr %s1972, 4
        %s1974 = scalar_lea.vmem %s10, %s1973
        // Predicated region
        $region73: #{tpu_custom_call.1} parent=59 // pred_check
          %p1975 = pneg %p258
        $region74: #{tpu_custom_call.1} parent=59 // pred_check_branch
          %1977 = sbr.rel (%p1975) target = $region76
        $region75: #{tpu_custom_call.1} parent=59 // pred_region
          _
        $region76: #{tpu_custom_call.1} parent=59 // pred_fallthru
          _
      $region60: #{tpu_custom_call.1} parent=5 // pred_fallthru
        _
      %p1978 = scmp.le.s32.totalorder 2, %s20
      // Predicated region
      $region77: #{tpu_custom_call.1} parent=5 // pred_check
        %p1979 = pneg %p1978
      $region78: #{tpu_custom_call.1} parent=5 // pred_check_branch
        %1981 = sbr.rel (%p1979) target = $region80
      $region79: #{tpu_custom_call.1} parent=5 // pred_region
        %s1982 = ssub.s32 %s20, 2
        // Predicated region
        $region81: #{tpu_custom_call.1} parent=79 // pred_check
          %p1983 = pneg %p264
        $region82: #{tpu_custom_call.1} parent=79 // pred_check_branch
          %1985 = sbr.rel (%p1983) target = $region84
        $region83: #{tpu_custom_call.1} parent=79 // pred_region
          %p1986 = scmp.lt.s32.totalorder %s26, 1
          %s1987 = scalar_select %p1986, %s26, 1
          %s1988 = smul.addr %s1987, 8
          %s1989 = smul.addr %s1988, 4
          %s1990 = scalar_lea.vmem %s10, %s1989
        $region84: #{tpu_custom_call.1} parent=79 // pred_fallthru
          _
      $region80: #{tpu_custom_call.1} parent=5 // pred_fallthru
        _
    $region6: #{tpu_custom_call.1} parent=1 // loop_footer
      %s24 = sadd.s32 1, %s20
    $region7: #{tpu_custom_call.1} parent=1 // loop_footer_branch
      %19 = sbr.rel target = $region3
    $region8: #{tpu_custom_call.1} parent=1 // loop_exit
      _
    %1991 = vsyncpa [#allocation3], 1
    %s1992 = scalar_lea.sflag [#allocation3], 1
    %1993 = vsyncpa %s1992, 1
    %1994 = vsyncpa [#allocation5], 1

</llo_original>
